<compile_context>
chip_gen: v6e
topology: v6e:2x2x1
jax: 0.10.0
libtpu: 0.0.40
codegen_flags: <defaults>
</compile_context>

<pallas_src>
import jax
import jax.numpy as jnp
from jax.experimental import pallas as pl
from jax.experimental.pallas import tpu as pltpu


def _round_up(x, m):
    return (x + m - 1) // m * m


def _make_kernel(num_wv, num_sp, num_ft, wh, sh, fh):
    def kernel(wv_ref, sp_ref, ft_ref,
               w1_ref, b1_ref, w2_ref, b2_ref, w3_ref, b3_ref,
               w4_ref, b4_ref, out_ref):
        # Hoist weight/bias loads out of the (trace-time unrolled) slot loops.
        w1t = w1_ref[...]
        b1 = b1_ref[...]
        w2t = w2_ref[...]
        b2 = b2_ref[...]
        w3t = w3_ref[...]
        b3 = b3_ref[...]
        b4 = b4_ref[...]

        acc = jnp.zeros(out_ref.shape, jnp.float32)
        off = 0

        # W4 rows were regrouped on the host (wordvec slots, then speech, then
        # feature), so every slice below is a contiguous 8-aligned row slice.
        for i in range(num_wv):
            h = jnp.maximum(
                jnp.dot(wv_ref[:, i, :], w1t,
                        preferred_element_type=jnp.float32) + b1, 0.0)
            acc += jnp.dot(h, w4_ref[off:off + wh, :],
                           preferred_element_type=jnp.float32)
            off += wh

        for i in range(num_sp):
            h = jnp.maximum(
                jnp.dot(sp_ref[:, i, :], w2t,
                        preferred_element_type=jnp.float32) + b2, 0.0)
            acc += jnp.dot(h, w4_ref[off:off + sh, :],
                           preferred_element_type=jnp.float32)
            off += sh

        for i in range(num_ft):
            h = jnp.maximum(
                jnp.dot(ft_ref[:, i, :], w3t,
                        preferred_element_type=jnp.float32) + b3, 0.0)
            acc += jnp.dot(h, w4_ref[off:off + fh, :],
                           preferred_element_type=jnp.float32)
            off += fh

        out_ref[...] = acc + b4

    return kernel


def multi_input_classifier(wordvec, speech, feature, params, *, tb=128):
    """Forward pass of MultiInputClassifierNet via a single Pallas kernel."""
    w1, b1, w2, b2, w3, b3, w4, b4 = params
    B, Nw, dw = wordvec.shape
    _, Ns, ds = speech.shape
    _, Nf, df = feature.shape
    assert Nw == Ns, "torch forward indexes speech with the wordvec loop index"
    wh, sh, fh = w1.shape[0], w2.shape[0], w3.shape[0]
    C = w4.shape[0]
    fc4_in = Nw * wh + Ns * sh + Nf * fh
    assert w4.shape[1] == fc4_in

    # ---------------- host-side layout preparation ----------------
    # fc1/fc2/fc3 weights in (in_features, out_features) so kernel does x @ w.
    w1t = jnp.asarray(w1).T
    w2t = jnp.asarray(w2).T
    w3t = jnp.asarray(w3).T

    # Regroup W4^T rows by input type (all wordvec slots, then speech, then
    # feature) and pad the class dim to a lane-dense multiple of 128.
    W4T = jnp.asarray(w4).T                      # (fc4_in, C)
    blk = wh + sh
    rows = [W4T[i * blk: i * blk + wh] for i in range(Nw)]
    rows += [W4T[i * blk + wh: (i + 1) * blk] for i in range(Ns)]
    base = Nw * blk
    rows += [W4T[base + i * fh: base + (i + 1) * fh] for i in range(Nf)]
    w4g = jnp.concatenate(rows, axis=0)          # (fc4_in, C), regrouped
    Cp = _round_up(C, 128)
    w4g = jnp.pad(w4g, ((0, 0), (0, Cp - C)))
    b4p = jnp.pad(b4, (0, Cp - C)).reshape(1, Cp)

    b1r = b1.reshape(1, wh)
    b2r = b2.reshape(1, sh)
    b3r = b3.reshape(1, fh)

    # ---------------- batch tiling (parallel grid axis) ----------------
    # Tile is a multiple of 8 sublanes; per-tile working set here is tiny, so it
    # comfortably fits the 64 MiB VMEM of v7x (and 128 MiB of v5e/v6e) with
    # double buffering.
    tb = max(8, min(tb, _round_up(B, 8)))
    tb = _round_up(tb, 8)
    Bp = _round_up(B, tb)
    pad = Bp - B
    wv = jnp.pad(wordvec, ((0, pad), (0, 0), (0, 0)))
    sp = jnp.pad(speech, ((0, pad), (0, 0), (0, 0)))
    ft = jnp.pad(feature, ((0, pad), (0, 0), (0, 0)))

    grid = (Bp // tb,)
    const2 = lambda b: (0, 0)                    # weights stay resident
    in_specs = [
        pl.BlockSpec((tb, Nw, dw), lambda b: (b, 0, 0)),
        pl.BlockSpec((tb, Ns, ds), lambda b: (b, 0, 0)),
        pl.BlockSpec((tb, Nf, df), lambda b: (b, 0, 0)),
        pl.BlockSpec((dw, wh), const2),
        pl.BlockSpec((1, wh), const2),
        pl.BlockSpec((ds, sh), const2),
        pl.BlockSpec((1, sh), const2),
        pl.BlockSpec((df, fh), const2),
        pl.BlockSpec((1, fh), const2),
        pl.BlockSpec((fc4_in, Cp), const2),
        pl.BlockSpec((1, Cp), const2),
    ]
    out_spec = pl.BlockSpec((tb, Cp), lambda b: (b, 0))

    inputs = (wv, sp, ft, w1t, b1r, w2t, b2r, w3t, b3r, w4g, b4p)
    flops = 2 * Bp * (Nw * dw * wh + Ns * ds * sh + Nf * df * fh + fc4_in * Cp)
    bytes_accessed = int(sum(int(x.size) * x.dtype.itemsize for x in inputs)
                         + Bp * Cp * 4)

    out_padded = pl.pallas_call(
        _make_kernel(Nw, Ns, Nf, wh, sh, fh),
        out_shape=jax.ShapeDtypeStruct((Bp, Cp), jnp.float32),
        grid=grid,
        in_specs=in_specs,
        out_specs=out_spec,
        compiler_params=pltpu.CompilerParams(
            dimension_semantics=("parallel",)),
        cost_estimate=pl.CostEstimate(
            flops=flops, transcendentals=0, bytes_accessed=bytes_accessed),
    )(*inputs)

    return out_padded[:B, :C]


def reference(wordvec, speech, feature, params):
    """Plain-JAX mirror of the torch forward (for correctness check)."""
    w1, b1, w2, b2, w3, b3, w4, b4 = params
    Nw = wordvec.shape[1]
    Nf = feature.shape[1]
    pieces = []
    for i in range(Nw):
        pieces.append(jnp.maximum(wordvec[:, i, :] @ w1.T + b1, 0.0))
        pieces.append(jnp.maximum(speech[:, i, :] @ w2.T + b2, 0.0))
    for i in range(Nf):
        pieces.append(jnp.maximum(feature[:, i, :] @ w3.T + b3, 0.0))
    fused = jnp.concatenate(pieces, axis=-1)
    return fused @ w4.T + b4


if __name__ == "__main__":
    # Small, forward-consistent shapes.  B=10 with tb=8 exercises both the
    # batch-padding path and a multi-step (2-tile) parallel grid.
    B = 10
    num_classes = 10
    wordvec_num, wordvec_dim, wordvec_hidden = 3, 16, 32
    speech_num, speech_dim, speech_hidden = 3, 8, 16
    feature_num, feature_dim, feature_hidden = 2, 12, 24
    fc4_in = (wordvec_num * wordvec_hidden
              + speech_num * speech_hidden
              + feature_num * feature_hidden)

    key = jax.random.PRNGKey(0)
    ks = jax.random.split(key, 12)
    wordvec = jax.random.normal(ks[0], (B, wordvec_num, wordvec_dim), jnp.float32)
    speech = jax.random.normal(ks[1], (B, speech_num, speech_dim), jnp.float32)
    feature = jax.random.normal(ks[2], (B, feature_num, feature_dim), jnp.float32)

    def lin(kw, kb, out_f, in_f):
        w = jax.random.normal(kw, (out_f, in_f), jnp.float32) * 0.05
        b = jax.random.normal(kb, (out_f,), jnp.float32) * 0.05
        return w, b

    w1, b1 = lin(ks[3], ks[4], wordvec_hidden, wordvec_dim)
    w2, b2 = lin(ks[5], ks[6], speech_hidden, speech_dim)
    w3, b3 = lin(ks[7], ks[8], feature_hidden, feature_dim)
    w4, b4 = lin(ks[9], ks[10], num_classes, fc4_in)
    params = (w1, b1, w2, b2, w3, b3, w4, b4)

    out = multi_input_classifier(wordvec, speech, feature, params, tb=8)
    out = jax.block_until_ready(out)

    ref = reference(wordvec, speech, feature, params)
    assert out.shape == (B, num_classes)
    assert jnp.allclose(out, ref, atol=1e-4, rtol=1e-4), "kernel/reference mismatch"
    print("KERNEL_OK")
</pallas_src>

<mosaic_0001>
module attributes {stable_mosaic.version = 11 : i64} {
  func.func @kernel(%arg0: i32, %arg1: memref<8x3x16xf32, #tpu.memory_space<vmem>>, %arg2: memref<8x3x8xf32, #tpu.memory_space<vmem>>, %arg3: memref<8x2x12xf32, #tpu.memory_space<vmem>>, %arg4: memref<16x32xf32, #tpu.memory_space<vmem>>, %arg5: memref<1x32xf32, #tpu.memory_space<vmem>>, %arg6: memref<8x16xf32, #tpu.memory_space<vmem>>, %arg7: memref<1x16xf32, #tpu.memory_space<vmem>>, %arg8: memref<12x24xf32, #tpu.memory_space<vmem>>, %arg9: memref<1x24xf32, #tpu.memory_space<vmem>>, %arg10: memref<192x128xf32, #tpu.memory_space<vmem>>, %arg11: memref<1x128xf32, #tpu.memory_space<vmem>>, %arg12: memref<8x128xf32, #tpu.memory_space<vmem>>) attributes {dimension_semantics = [#tpu.dimension_semantics<parallel>], iteration_bounds = array<i64: 2>, scalar_prefetch = 0 : i64, scratch_operands = 0 : i64, tpu.core_type = #tpu.core_type<tc>, window_params = [{transform_indices = @transform_0, window_bounds = array<i64: 8, 3, 16>}, {transform_indices = @transform_1, window_bounds = array<i64: 8, 3, 8>}, {transform_indices = @transform_2, window_bounds = array<i64: 8, 2, 12>}, {pipeline_mode = #tpu.pipeline_mode<synchronous>, transform_indices = @transform_3, window_bounds = array<i64: 16, 32>}, {pipeline_mode = #tpu.pipeline_mode<synchronous>, transform_indices = @transform_4, window_bounds = array<i64: 1, 32>}, {pipeline_mode = #tpu.pipeline_mode<synchronous>, transform_indices = @transform_5, window_bounds = array<i64: 8, 16>}, {pipeline_mode = #tpu.pipeline_mode<synchronous>, transform_indices = @transform_6, window_bounds = array<i64: 1, 16>}, {pipeline_mode = #tpu.pipeline_mode<synchronous>, transform_indices = @transform_7, window_bounds = array<i64: 12, 24>}, {pipeline_mode = #tpu.pipeline_mode<synchronous>, transform_indices = @transform_8, window_bounds = array<i64: 1, 24>}, {pipeline_mode = #tpu.pipeline_mode<synchronous>, transform_indices = @transform_9, window_bounds = array<i64: 192, 128>}, {pipeline_mode = #tpu.pipeline_mode<synchronous>, transform_indices = @transform_10, window_bounds = array<i64: 1, 128>}, {transform_indices = @transform_11, window_bounds = array<i64: 8, 128>}]} {
    %c0 = arith.constant 0 : index
    %c0_0 = arith.constant 0 : index
    %0 = vector.load %arg4[%c0, %c0_0] : memref<16x32xf32, #tpu.memory_space<vmem>>, vector<16x32xf32>
    %c0_1 = arith.constant 0 : index
    %c0_2 = arith.constant 0 : index
    %1 = vector.load %arg5[%c0_1, %c0_2] : memref<1x32xf32, #tpu.memory_space<vmem>>, vector<1x32xf32>
    %c0_3 = arith.constant 0 : index
    %c0_4 = arith.constant 0 : index
    %2 = vector.load %arg6[%c0_3, %c0_4] : memref<8x16xf32, #tpu.memory_space<vmem>>, vector<8x16xf32>
    %c0_5 = arith.constant 0 : index
    %c0_6 = arith.constant 0 : index
    %3 = vector.load %arg7[%c0_5, %c0_6] : memref<1x16xf32, #tpu.memory_space<vmem>>, vector<1x16xf32>
    %c0_7 = arith.constant 0 : index
    %c0_8 = arith.constant 0 : index
    %4 = vector.load %arg8[%c0_7, %c0_8] : memref<12x24xf32, #tpu.memory_space<vmem>>, vector<12x24xf32>
    %c0_9 = arith.constant 0 : index
    %c0_10 = arith.constant 0 : index
    %5 = vector.load %arg9[%c0_9, %c0_10] : memref<1x24xf32, #tpu.memory_space<vmem>>, vector<1x24xf32>
    %c0_11 = arith.constant 0 : index
    %c0_12 = arith.constant 0 : index
    %6 = vector.load %arg11[%c0_11, %c0_12] : memref<1x128xf32, #tpu.memory_space<vmem>>, vector<1x128xf32>
    %cst = arith.constant 0.000000e+00 : f32
    %7 = vector.broadcast %cst : f32 to vector<8x128xf32>
    %c0_13 = arith.constant 0 : index
    %c0_14 = arith.constant 0 : index
    %c0_15 = arith.constant 0 : index
    %8 = vector.load %arg1[%c0_13, %c0_14, %c0_15] : memref<8x3x16xf32, #tpu.memory_space<vmem>>, vector<8x1x16xf32>
    %9 = vector.shape_cast %8 : vector<8x1x16xf32> to vector<8x16xf32>
    %cst_16 = arith.constant dense<0.000000e+00> : vector<8x32xf32>
    %10 = tpu.matmul %9, %0, %cst_16 {dimension_numbers = #tpu.dot_dimension_numbers<[1], [0], [0], [1], [0, 0, 1, 1], [], []>} : vector<8x16xf32>, vector<16x32xf32>, vector<8x32xf32> -> vector<8x32xf32>
    %11 = vector.broadcast %1 : vector<1x32xf32> to vector<8x32xf32>
    %12 = arith.addf %10, %11 : vector<8x32xf32>
    %cst_17 = arith.constant 0.000000e+00 : f32
    %13 = vector.broadcast %cst_17 : f32 to vector<8x32xf32>
    %14 = arith.maximumf %12, %13 : vector<8x32xf32>
    %c0_18 = arith.constant 0 : index
    %c0_19 = arith.constant 0 : index
    %15 = vector.load %arg10[%c0_18, %c0_19] : memref<192x128xf32, #tpu.memory_space<vmem>>, vector<32x128xf32>
    %cst_20 = arith.constant dense<0.000000e+00> : vector<8x128xf32>
    %16 = tpu.matmul %14, %15, %cst_20 {dimension_numbers = #tpu.dot_dimension_numbers<[1], [0], [0], [1], [0, 0, 1, 1], [], []>} : vector<8x32xf32>, vector<32x128xf32>, vector<8x128xf32> -> vector<8x128xf32>
    %17 = arith.addf %7, %16 : vector<8x128xf32>
    %c0_21 = arith.constant 0 : index
    %c1 = arith.constant 1 : index
    %c0_22 = arith.constant 0 : index
    %18 = vector.load %arg1[%c0_21, %c1, %c0_22] : memref<8x3x16xf32, #tpu.memory_space<vmem>>, vector<8x1x16xf32>
    %19 = vector.shape_cast %18 : vector<8x1x16xf32> to vector<8x16xf32>
    %cst_23 = arith.constant dense<0.000000e+00> : vector<8x32xf32>
    %20 = tpu.matmul %19, %0, %cst_23 {dimension_numbers = #tpu.dot_dimension_numbers<[1], [0], [0], [1], [0, 0, 1, 1], [], []>} : vector<8x16xf32>, vector<16x32xf32>, vector<8x32xf32> -> vector<8x32xf32>
    %21 = vector.broadcast %1 : vector<1x32xf32> to vector<8x32xf32>
    %22 = arith.addf %20, %21 : vector<8x32xf32>
    %cst_24 = arith.constant 0.000000e+00 : f32
    %23 = vector.broadcast %cst_24 : f32 to vector<8x32xf32>
    %24 = arith.maximumf %22, %23 : vector<8x32xf32>
    %c32 = arith.constant 32 : index
    %c0_25 = arith.constant 0 : index
    %25 = vector.load %arg10[%c32, %c0_25] : memref<192x128xf32, #tpu.memory_space<vmem>>, vector<32x128xf32>
    %cst_26 = arith.constant dense<0.000000e+00> : vector<8x128xf32>
    %26 = tpu.matmul %24, %25, %cst_26 {dimension_numbers = #tpu.dot_dimension_numbers<[1], [0], [0], [1], [0, 0, 1, 1], [], []>} : vector<8x32xf32>, vector<32x128xf32>, vector<8x128xf32> -> vector<8x128xf32>
    %27 = arith.addf %17, %26 : vector<8x128xf32>
    %c0_27 = arith.constant 0 : index
    %c2 = arith.constant 2 : index
    %c0_28 = arith.constant 0 : index
    %28 = vector.load %arg1[%c0_27, %c2, %c0_28] : memref<8x3x16xf32, #tpu.memory_space<vmem>>, vector<8x1x16xf32>
    %29 = vector.shape_cast %28 : vector<8x1x16xf32> to vector<8x16xf32>
    %cst_29 = arith.constant dense<0.000000e+00> : vector<8x32xf32>
    %30 = tpu.matmul %29, %0, %cst_29 {dimension_numbers = #tpu.dot_dimension_numbers<[1], [0], [0], [1], [0, 0, 1, 1], [], []>} : vector<8x16xf32>, vector<16x32xf32>, vector<8x32xf32> -> vector<8x32xf32>
    %31 = vector.broadcast %1 : vector<1x32xf32> to vector<8x32xf32>
    %32 = arith.addf %30, %31 : vector<8x32xf32>
    %cst_30 = arith.constant 0.000000e+00 : f32
    %33 = vector.broadcast %cst_30 : f32 to vector<8x32xf32>
    %34 = arith.maximumf %32, %33 : vector<8x32xf32>
    %c64 = arith.constant 64 : index
    %c0_31 = arith.constant 0 : index
    %35 = vector.load %arg10[%c64, %c0_31] : memref<192x128xf32, #tpu.memory_space<vmem>>, vector<32x128xf32>
    %cst_32 = arith.constant dense<0.000000e+00> : vector<8x128xf32>
    %36 = tpu.matmul %34, %35, %cst_32 {dimension_numbers = #tpu.dot_dimension_numbers<[1], [0], [0], [1], [0, 0, 1, 1], [], []>} : vector<8x32xf32>, vector<32x128xf32>, vector<8x128xf32> -> vector<8x128xf32>
    %37 = arith.addf %27, %36 : vector<8x128xf32>
    %c0_33 = arith.constant 0 : index
    %c0_34 = arith.constant 0 : index
    %c0_35 = arith.constant 0 : index
    %38 = vector.load %arg2[%c0_33, %c0_34, %c0_35] : memref<8x3x8xf32, #tpu.memory_space<vmem>>, vector<8x1x8xf32>
    %39 = vector.shape_cast %38 : vector<8x1x8xf32> to vector<8x8xf32>
    %cst_36 = arith.constant dense<0.000000e+00> : vector<8x16xf32>
    %40 = tpu.matmul %39, %2, %cst_36 {dimension_numbers = #tpu.dot_dimension_numbers<[1], [0], [0], [1], [0, 0, 1, 1], [], []>} : vector<8x8xf32>, vector<8x16xf32>, vector<8x16xf32> -> vector<8x16xf32>
    %41 = vector.broadcast %3 : vector<1x16xf32> to vector<8x16xf32>
    %42 = arith.addf %40, %41 : vector<8x16xf32>
    %cst_37 = arith.constant 0.000000e+00 : f32
    %43 = vector.broadcast %cst_37 : f32 to vector<8x16xf32>
    %44 = arith.maximumf %42, %43 : vector<8x16xf32>
    %c96 = arith.constant 96 : index
    %c0_38 = arith.constant 0 : index
    %45 = vector.load %arg10[%c96, %c0_38] : memref<192x128xf32, #tpu.memory_space<vmem>>, vector<16x128xf32>
    %cst_39 = arith.constant dense<0.000000e+00> : vector<8x128xf32>
    %46 = tpu.matmul %44, %45, %cst_39 {dimension_numbers = #tpu.dot_dimension_numbers<[1], [0], [0], [1], [0, 0, 1, 1], [], []>} : vector<8x16xf32>, vector<16x128xf32>, vector<8x128xf32> -> vector<8x128xf32>
    %47 = arith.addf %37, %46 : vector<8x128xf32>
    %c0_40 = arith.constant 0 : index
    %c1_41 = arith.constant 1 : index
    %c0_42 = arith.constant 0 : index
    %48 = vector.load %arg2[%c0_40, %c1_41, %c0_42] : memref<8x3x8xf32, #tpu.memory_space<vmem>>, vector<8x1x8xf32>
    %49 = vector.shape_cast %48 : vector<8x1x8xf32> to vector<8x8xf32>
    %cst_43 = arith.constant dense<0.000000e+00> : vector<8x16xf32>
    %50 = tpu.matmul %49, %2, %cst_43 {dimension_numbers = #tpu.dot_dimension_numbers<[1], [0], [0], [1], [0, 0, 1, 1], [], []>} : vector<8x8xf32>, vector<8x16xf32>, vector<8x16xf32> -> vector<8x16xf32>
    %51 = vector.broadcast %3 : vector<1x16xf32> to vector<8x16xf32>
    %52 = arith.addf %50, %51 : vector<8x16xf32>
    %cst_44 = arith.constant 0.000000e+00 : f32
    %53 = vector.broadcast %cst_44 : f32 to vector<8x16xf32>
    %54 = arith.maximumf %52, %53 : vector<8x16xf32>
    %c112 = arith.constant 112 : index
    %c0_45 = arith.constant 0 : index
    %55 = vector.load %arg10[%c112, %c0_45] : memref<192x128xf32, #tpu.memory_space<vmem>>, vector<16x128xf32>
    %cst_46 = arith.constant dense<0.000000e+00> : vector<8x128xf32>
    %56 = tpu.matmul %54, %55, %cst_46 {dimension_numbers = #tpu.dot_dimension_numbers<[1], [0], [0], [1], [0, 0, 1, 1], [], []>} : vector<8x16xf32>, vector<16x128xf32>, vector<8x128xf32> -> vector<8x128xf32>
    %57 = arith.addf %47, %56 : vector<8x128xf32>
    %c0_47 = arith.constant 0 : index
    %c2_48 = arith.constant 2 : index
    %c0_49 = arith.constant 0 : index
    %58 = vector.load %arg2[%c0_47, %c2_48, %c0_49] : memref<8x3x8xf32, #tpu.memory_space<vmem>>, vector<8x1x8xf32>
    %59 = vector.shape_cast %58 : vector<8x1x8xf32> to vector<8x8xf32>
    %cst_50 = arith.constant dense<0.000000e+00> : vector<8x16xf32>
    %60 = tpu.matmul %59, %2, %cst_50 {dimension_numbers = #tpu.dot_dimension_numbers<[1], [0], [0], [1], [0, 0, 1, 1], [], []>} : vector<8x8xf32>, vector<8x16xf32>, vector<8x16xf32> -> vector<8x16xf32>
    %61 = vector.broadcast %3 : vector<1x16xf32> to vector<8x16xf32>
    %62 = arith.addf %60, %61 : vector<8x16xf32>
    %cst_51 = arith.constant 0.000000e+00 : f32
    %63 = vector.broadcast %cst_51 : f32 to vector<8x16xf32>
    %64 = arith.maximumf %62, %63 : vector<8x16xf32>
    %c128 = arith.constant 128 : index
    %c0_52 = arith.constant 0 : index
    %65 = vector.load %arg10[%c128, %c0_52] : memref<192x128xf32, #tpu.memory_space<vmem>>, vector<16x128xf32>
    %cst_53 = arith.constant dense<0.000000e+00> : vector<8x128xf32>
    %66 = tpu.matmul %64, %65, %cst_53 {dimension_numbers = #tpu.dot_dimension_numbers<[1], [0], [0], [1], [0, 0, 1, 1], [], []>} : vector<8x16xf32>, vector<16x128xf32>, vector<8x128xf32> -> vector<8x128xf32>
    %67 = arith.addf %57, %66 : vector<8x128xf32>
    %c0_54 = arith.constant 0 : index
    %c0_55 = arith.constant 0 : index
    %c0_56 = arith.constant 0 : index
    %68 = vector.load %arg3[%c0_54, %c0_55, %c0_56] : memref<8x2x12xf32, #tpu.memory_space<vmem>>, vector<8x1x12xf32>
    %69 = vector.shape_cast %68 : vector<8x1x12xf32> to vector<8x12xf32>
    %cst_57 = arith.constant dense<0.000000e+00> : vector<8x24xf32>
    %70 = tpu.matmul %69, %4, %cst_57 {dimension_numbers = #tpu.dot_dimension_numbers<[1], [0], [0], [1], [0, 0, 1, 1], [], []>} : vector<8x12xf32>, vector<12x24xf32>, vector<8x24xf32> -> vector<8x24xf32>
    %71 = vector.broadcast %5 : vector<1x24xf32> to vector<8x24xf32>
    %72 = arith.addf %70, %71 : vector<8x24xf32>
    %cst_58 = arith.constant 0.000000e+00 : f32
    %73 = vector.broadcast %cst_58 : f32 to vector<8x24xf32>
    %74 = arith.maximumf %72, %73 : vector<8x24xf32>
    %c144 = arith.constant 144 : index
    %c0_59 = arith.constant 0 : index
    %75 = vector.load %arg10[%c144, %c0_59] : memref<192x128xf32, #tpu.memory_space<vmem>>, vector<24x128xf32>
    %cst_60 = arith.constant dense<0.000000e+00> : vector<8x128xf32>
    %76 = tpu.matmul %74, %75, %cst_60 {dimension_numbers = #tpu.dot_dimension_numbers<[1], [0], [0], [1], [0, 0, 1, 1], [], []>} : vector<8x24xf32>, vector<24x128xf32>, vector<8x128xf32> -> vector<8x128xf32>
    %77 = arith.addf %67, %76 : vector<8x128xf32>
    %c0_61 = arith.constant 0 : index
    %c1_62 = arith.constant 1 : index
    %c0_63 = arith.constant 0 : index
    %78 = vector.load %arg3[%c0_61, %c1_62, %c0_63] : memref<8x2x12xf32, #tpu.memory_space<vmem>>, vector<8x1x12xf32>
    %79 = vector.shape_cast %78 : vector<8x1x12xf32> to vector<8x12xf32>
    %cst_64 = arith.constant dense<0.000000e+00> : vector<8x24xf32>
    %80 = tpu.matmul %79, %4, %cst_64 {dimension_numbers = #tpu.dot_dimension_numbers<[1], [0], [0], [1], [0, 0, 1, 1], [], []>} : vector<8x12xf32>, vector<12x24xf32>, vector<8x24xf32> -> vector<8x24xf32>
    %81 = vector.broadcast %5 : vector<1x24xf32> to vector<8x24xf32>
    %82 = arith.addf %80, %81 : vector<8x24xf32>
    %cst_65 = arith.constant 0.000000e+00 : f32
    %83 = vector.broadcast %cst_65 : f32 to vector<8x24xf32>
    %84 = arith.maximumf %82, %83 : vector<8x24xf32>
    %c168 = arith.constant 168 : index
    %c0_66 = arith.constant 0 : index
    %85 = vector.load %arg10[%c168, %c0_66] : memref<192x128xf32, #tpu.memory_space<vmem>>, vector<24x128xf32>
    %cst_67 = arith.constant dense<0.000000e+00> : vector<8x128xf32>
    %86 = tpu.matmul %84, %85, %cst_67 {dimension_numbers = #tpu.dot_dimension_numbers<[1], [0], [0], [1], [0, 0, 1, 1], [], []>} : vector<8x24xf32>, vector<24x128xf32>, vector<8x128xf32> -> vector<8x128xf32>
    %87 = arith.addf %77, %86 : vector<8x128xf32>
    %88 = vector.broadcast %6 : vector<1x128xf32> to vector<8x128xf32>
    %89 = arith.addf %87, %88 : vector<8x128xf32>
    %c0_68 = arith.constant 0 : index
    %c0_69 = arith.constant 0 : index
    %90 = vector.load %arg12[%c0_68, %c0_69] : memref<8x128xf32, #tpu.memory_space<vmem>>, vector<8x128xf32>
    tpu.vector_store %arg12[%c0_68, %c0_69], %89 {strides = array<i32>} : memref<8x128xf32, #tpu.memory_space<vmem>>, vector<8x128xf32>,
    return
  }
  func.func @transform_0(%arg0: i32) -> (i32, i32, i32) {
    %c0_i32 = arith.constant 0 : i32
    %c0_i32_0 = arith.constant 0 : i32
    %c0_i32_1 = arith.constant 0 : i32
    return %arg0, %c0_i32, %c0_i32_0 : i32, i32, i32
  }
  func.func @transform_1(%arg0: i32) -> (i32, i32, i32) {
    %c0_i32 = arith.constant 0 : i32
    %c0_i32_0 = arith.constant 0 : i32
    %c0_i32_1 = arith.constant 0 : i32
    return %arg0, %c0_i32, %c0_i32_0 : i32, i32, i32
  }
  func.func @transform_2(%arg0: i32) -> (i32, i32, i32) {
    %c0_i32 = arith.constant 0 : i32
    %c0_i32_0 = arith.constant 0 : i32
    %c0_i32_1 = arith.constant 0 : i32
    return %arg0, %c0_i32, %c0_i32_0 : i32, i32, i32
  }
  func.func @transform_3(%arg0: i32) -> (i32, i32) {
    %c0_i32 = arith.constant 0 : i32
    %c0_i32_0 = arith.constant 0 : i32
    %c0_i32_1 = arith.constant 0 : i32
    return %c0_i32, %c0_i32_0 : i32, i32
  }
  func.func @transform_4(%arg0: i32) -> (i32, i32) {
    %c0_i32 = arith.constant 0 : i32
    %c0_i32_0 = arith.constant 0 : i32
    %c0_i32_1 = arith.constant 0 : i32
    return %c0_i32, %c0_i32_0 : i32, i32
  }
  func.func @transform_5(%arg0: i32) -> (i32, i32) {
    %c0_i32 = arith.constant 0 : i32
    %c0_i32_0 = arith.constant 0 : i32
    %c0_i32_1 = arith.constant 0 : i32
    return %c0_i32, %c0_i32_0 : i32, i32
  }
  func.func @transform_6(%arg0: i32) -> (i32, i32) {
    %c0_i32 = arith.constant 0 : i32
    %c0_i32_0 = arith.constant 0 : i32
    %c0_i32_1 = arith.constant 0 : i32
    return %c0_i32, %c0_i32_0 : i32, i32
  }
  func.func @transform_7(%arg0: i32) -> (i32, i32) {
    %c0_i32 = arith.constant 0 : i32
    %c0_i32_0 = arith.constant 0 : i32
    %c0_i32_1 = arith.constant 0 : i32
    return %c0_i32, %c0_i32_0 : i32, i32
  }
  func.func @transform_8(%arg0: i32) -> (i32, i32) {
    %c0_i32 = arith.constant 0 : i32
    %c0_i32_0 = arith.constant 0 : i32
    %c0_i32_1 = arith.constant 0 : i32
    return %c0_i32, %c0_i32_0 : i32, i32
  }
  func.func @transform_9(%arg0: i32) -> (i32, i32) {
    %c0_i32 = arith.constant 0 : i32
    %c0_i32_0 = arith.constant 0 : i32
    %c0_i32_1 = arith.constant 0 : i32
    return %c0_i32, %c0_i32_0 : i32, i32
  }
  func.func @transform_10(%arg0: i32) -> (i32, i32) {
    %c0_i32 = arith.constant 0 : i32
    %c0_i32_0 = arith.constant 0 : i32
    %c0_i32_1 = arith.constant 0 : i32
    return %c0_i32, %c0_i32_0 : i32, i32
  }
  func.func @transform_11(%arg0: i32) -> (i32, i32) {
    %c0_i32 = arith.constant 0 : i32
    %c0_i32_0 = arith.constant 0 : i32
    return %arg0, %c0_i32 : i32, i32
  }
}

</mosaic_0001>

<llo_original>
// kernel: tpu_custom_call.1
$region0: #{tpu_custom_call.1}
  #allocation0 [shape = 'u32[]', space=smem, size = 0x4, offset = 0x4, fixed_abs, tag = 'smem constant byte address 0x4 - core index']
  #allocation1 [shape = 'u32[144,128]{1,0:T(1,128)}', space=vmem, size = 0x12000, scoped, tag = 'internal scratch']
  %s0 = inlined_call_operand.vmem [shape: f32[16,3,16], index: 0, kind: input, shape index: {}]
  %s1 = inlined_call_operand.vmem [shape: f32[16,3,8], index: 1, kind: input, shape index: {}]
  %s2 = inlined_call_operand.vmem [shape: f32[16,2,12], index: 2, kind: input, shape index: {}]
  %s3 = inlined_call_operand.vmem [shape: f32[16,32], index: 3, kind: input, shape index: {}]
  %s4 = inlined_call_operand.vmem [shape: f32[1,32], index: 4, kind: input, shape index: {}]
  %s5 = inlined_call_operand.vmem [shape: f32[8,16], index: 5, kind: input, shape index: {}]
  %s6 = inlined_call_operand.vmem [shape: f32[1,16], index: 6, kind: input, shape index: {}]
  %s7 = inlined_call_operand.vmem [shape: f32[12,24], index: 7, kind: input, shape index: {}]
  %s8 = inlined_call_operand.vmem [shape: f32[1,24], index: 8, kind: input, shape index: {}]
  %s9 = inlined_call_operand.vmem [shape: f32[192,128], index: 9, kind: input, shape index: {}]
  %s10 = inlined_call_operand.vmem [shape: f32[1,128], index: 10, kind: input, shape index: {}]
  %s11 = inlined_call_operand.hbm [shape: f32[16,128], index: 11, kind: output, shape index: {}]
  %s12 = sld [smem:[#allocation0]]
  $region77: #{tpu_custom_call.1} parent=0
    _
  %s14 = ssub.s32 1, %s12
  %s15 = scalar_select 0, %s14, %s12
  $region1: #{tpu_custom_call.1} parent=0
    #allocation2 [shape = 'u8[8192]{0}', space=vmem, size = 0x2000, scoped, tag = 'output window, operand 0']
    #allocation3 [shape = 's32[2]{0}', space=sflag, size = 0x8, scoped, tag = 'scoped memory for tpu_custom_call.1']
    %16 = vsyncpa [#allocation3], 0
    %s17 = scalar_lea.sflag [#allocation3], 1
    %18 = vsyncpa %s17, 0
    loop: start=0, step=1, limit=4
    $region2: #{tpu_custom_call.1} parent=1 // loop_pre_header
      _
    $region3: #{tpu_custom_call.1} parent=1 // loop_header
      %s20 = sphi 0, %s24
      %p21 = scmp.ge.s32.totalorder %s20, 4
      %s30 = sphi 0, %s32
      %s33 = sphi 0, %s30
      %s34 = sphi 0, %s33
      %s50 = sphi 0, %s34
      %s56 = sphi 0, %s58
      %s59 = sphi 0, %s56
      %s60 = sphi 0, %s59
      %s76 = sphi 0, %s60
      %s82 = sphi 0, %s84
      %s85 = sphi 0, %s82
      %s86 = sphi 0, %s85
      %s102 = sphi 0, %s86
      %s106 = sphi 0, %s106
      %s108 = sphi 0, %s106
      %s109 = sphi 0, %s108
      %s123 = sphi 0, %s109
      %s127 = sphi 0, %s127
      %s129 = sphi 0, %s127
      %s130 = sphi 0, %s129
      %s144 = sphi 0, %s130
      %s148 = sphi 0, %s148
      %s150 = sphi 0, %s148
      %s151 = sphi 0, %s150
      %s165 = sphi 0, %s151
      %s169 = sphi 0, %s169
      %s171 = sphi 0, %s169
      %s172 = sphi 0, %s171
      %s186 = sphi 0, %s172
      %s190 = sphi 0, %s190
      %s192 = sphi 0, %s190
      %s193 = sphi 0, %s192
      %s207 = sphi 0, %s193
      %s211 = sphi 0, %s211
      %s213 = sphi 0, %s211
      %s214 = sphi 0, %s213
      %s228 = sphi 0, %s214
      %s232 = sphi 0, %s232
      %s234 = sphi 0, %s232
      %s235 = sphi 0, %s234
      %s249 = sphi 0, %s235
      %s253 = sphi 0, %s253
      %s255 = sphi 0, %s253
      %s256 = sphi 0, %s255
      %s270 = sphi 0, %s256
      %s276 = sphi 0, %s278
      %s279 = sphi 0, %s276
      %s280 = sphi 0, %s279
      %s296 = sphi 0, %s280
    $region4: #{tpu_custom_call.1} parent=1 // loop_header_branch
      %23 = sbr.rel (%p21) target = $region8
    $region5: #{tpu_custom_call.1} parent=1 // loop_body
      %s25 = ssub.s32 %s20, 1
      %s26 = ssub.s32 %s20, 2
      %s27 = sadd.s32 %s20, 1
      %s28 = ssub.s32 %s20, %s27
      %p29 = scmp.eq.s32.totalorder %s28, 0
      %s31 = sadd.s32 %s30, 1
      %s32 = scalar_select %p29, %s30, %s31
      %p35 = pneg %p29
      %p36 = scmp.eq.s32.totalorder %s20, 1
      %p37 = por %p35, %p36
      %p38 = scmp.ne.s32.totalorder %s30, %s33
      %p39 = scmp.eq.s32.totalorder %s20, 0
      %p40 = por %p38, %p39
      %p41 = scmp.ne.s32.totalorder %s30, %s33
      %p42 = scmp.eq.s32.totalorder %s25, 1
      %p43 = por %p41, %p42
      %p44 = scmp.ne.s32.totalorder %s33, %s34
      %p45 = scmp.eq.s32.totalorder %s25, 0
      %p46 = por %p44, %p45
      %p47 = scmp.ne.s32.totalorder %s33, %s34
      %p48 = scmp.eq.s32.totalorder %s26, 1
      %p49 = por %p47, %p48
      %p51 = scmp.ne.s32.totalorder %s34, %s50
      %p52 = scmp.eq.s32.totalorder %s26, 0
      %p53 = por %p51, %p52
      %s54 = ssub.s32 %s20, %s27
      %p55 = scmp.eq.s32.totalorder %s54, 0
      %s57 = sadd.s32 %s56, 1
      %s58 = scalar_select %p55, %s56, %s57
      %p61 = pneg %p55
      %p62 = scmp.eq.s32.totalorder %s20, 1
      %p63 = por %p61, %p62
      %p64 = scmp.ne.s32.totalorder %s56, %s59
      %p65 = scmp.eq.s32.totalorder %s20, 0
      %p66 = por %p64, %p65
      %p67 = scmp.ne.s32.totalorder %s56, %s59
      %p68 = scmp.eq.s32.totalorder %s25, 1
      %p69 = por %p67, %p68
      %p70 = scmp.ne.s32.totalorder %s59, %s60
      %p71 = scmp.eq.s32.totalorder %s25, 0
      %p72 = por %p70, %p71
      %p73 = scmp.ne.s32.totalorder %s59, %s60
      %p74 = scmp.eq.s32.totalorder %s26, 1
      %p75 = por %p73, %p74
      %p77 = scmp.ne.s32.totalorder %s60, %s76
      %p78 = scmp.eq.s32.totalorder %s26, 0
      %p79 = por %p77, %p78
      %s80 = ssub.s32 %s20, %s27
      %p81 = scmp.eq.s32.totalorder %s80, 0
      %s83 = sadd.s32 %s82, 1
      %s84 = scalar_select %p81, %s82, %s83
      %p87 = pneg %p81
      %p88 = scmp.eq.s32.totalorder %s20, 1
      %p89 = por %p87, %p88
      %p90 = scmp.ne.s32.totalorder %s82, %s85
      %p91 = scmp.eq.s32.totalorder %s20, 0
      %p92 = por %p90, %p91
      %p93 = scmp.ne.s32.totalorder %s82, %s85
      %p94 = scmp.eq.s32.totalorder %s25, 1
      %p95 = por %p93, %p94
      %p96 = scmp.ne.s32.totalorder %s85, %s86
      %p97 = scmp.eq.s32.totalorder %s25, 0
      %p98 = por %p96, %p97
      %p99 = scmp.ne.s32.totalorder %s85, %s86
      %p100 = scmp.eq.s32.totalorder %s26, 1
      %p101 = por %p99, %p100
      %p103 = scmp.ne.s32.totalorder %s86, %s102
      %p104 = scmp.eq.s32.totalorder %s26, 0
      %p105 = por %p103, %p104
      %s107 = sadd.s32 %s106, 1
      %p110 = scmp.eq.s32.totalorder %s20, 1
      %p111 = scmp.ne.s32.totalorder %s106, %s108
      %p112 = scmp.eq.s32.totalorder %s20, 0
      %p113 = por %p111, %p112
      %p114 = scmp.ne.s32.totalorder %s106, %s108
      %p115 = scmp.eq.s32.totalorder %s25, 1
      %p116 = por %p114, %p115
      %p117 = scmp.ne.s32.totalorder %s108, %s109
      %p118 = scmp.eq.s32.totalorder %s25, 0
      %p119 = por %p117, %p118
      %p120 = scmp.ne.s32.totalorder %s108, %s109
      %p121 = scmp.eq.s32.totalorder %s26, 1
      %p122 = por %p120, %p121
      %p124 = scmp.ne.s32.totalorder %s109, %s123
      %p125 = scmp.eq.s32.totalorder %s26, 0
      %p126 = por %p124, %p125
      %s128 = sadd.s32 %s127, 1
      %p131 = scmp.eq.s32.totalorder %s20, 1
      %p132 = scmp.ne.s32.totalorder %s127, %s129
      %p133 = scmp.eq.s32.totalorder %s20, 0
      %p134 = por %p132, %p133
      %p135 = scmp.ne.s32.totalorder %s127, %s129
      %p136 = scmp.eq.s32.totalorder %s25, 1
      %p137 = por %p135, %p136
      %p138 = scmp.ne.s32.totalorder %s129, %s130
      %p139 = scmp.eq.s32.totalorder %s25, 0
      %p140 = por %p138, %p139
      %p141 = scmp.ne.s32.totalorder %s129, %s130
      %p142 = scmp.eq.s32.totalorder %s26, 1
      %p143 = por %p141, %p142
      %p145 = scmp.ne.s32.totalorder %s130, %s144
      %p146 = scmp.eq.s32.totalorder %s26, 0
      %p147 = por %p145, %p146
      %s149 = sadd.s32 %s148, 1
      %p152 = scmp.eq.s32.totalorder %s20, 1
      %p153 = scmp.ne.s32.totalorder %s148, %s150
      %p154 = scmp.eq.s32.totalorder %s20, 0
      %p155 = por %p153, %p154
      %p156 = scmp.ne.s32.totalorder %s148, %s150
      %p157 = scmp.eq.s32.totalorder %s25, 1
      %p158 = por %p156, %p157
      %p159 = scmp.ne.s32.totalorder %s150, %s151
      %p160 = scmp.eq.s32.totalorder %s25, 0
      %p161 = por %p159, %p160
      %p162 = scmp.ne.s32.totalorder %s150, %s151
      %p163 = scmp.eq.s32.totalorder %s26, 1
      %p164 = por %p162, %p163
      %p166 = scmp.ne.s32.totalorder %s151, %s165
      %p167 = scmp.eq.s32.totalorder %s26, 0
      %p168 = por %p166, %p167
      %s170 = sadd.s32 %s169, 1
      %p173 = scmp.eq.s32.totalorder %s20, 1
      %p174 = scmp.ne.s32.totalorder %s169, %s171
      %p175 = scmp.eq.s32.totalorder %s20, 0
      %p176 = por %p174, %p175
      %p177 = scmp.ne.s32.totalorder %s169, %s171
      %p178 = scmp.eq.s32.totalorder %s25, 1
      %p179 = por %p177, %p178
      %p180 = scmp.ne.s32.totalorder %s171, %s172
      %p181 = scmp.eq.s32.totalorder %s25, 0
      %p182 = por %p180, %p181
      %p183 = scmp.ne.s32.totalorder %s171, %s172
      %p184 = scmp.eq.s32.totalorder %s26, 1
      %p185 = por %p183, %p184
      %p187 = scmp.ne.s32.totalorder %s172, %s186
      %p188 = scmp.eq.s32.totalorder %s26, 0
      %p189 = por %p187, %p188
      %s191 = sadd.s32 %s190, 1
      %p194 = scmp.eq.s32.totalorder %s20, 1
      %p195 = scmp.ne.s32.totalorder %s190, %s192
      %p196 = scmp.eq.s32.totalorder %s20, 0
      %p197 = por %p195, %p196
      %p198 = scmp.ne.s32.totalorder %s190, %s192
      %p199 = scmp.eq.s32.totalorder %s25, 1
      %p200 = por %p198, %p199
      %p201 = scmp.ne.s32.totalorder %s192, %s193
      %p202 = scmp.eq.s32.totalorder %s25, 0
      %p203 = por %p201, %p202
      %p204 = scmp.ne.s32.totalorder %s192, %s193
      %p205 = scmp.eq.s32.totalorder %s26, 1
      %p206 = por %p204, %p205
      %p208 = scmp.ne.s32.totalorder %s193, %s207
      %p209 = scmp.eq.s32.totalorder %s26, 0
      %p210 = por %p208, %p209
      %s212 = sadd.s32 %s211, 1
      %p215 = scmp.eq.s32.totalorder %s20, 1
      %p216 = scmp.ne.s32.totalorder %s211, %s213
      %p217 = scmp.eq.s32.totalorder %s20, 0
      %p218 = por %p216, %p217
      %p219 = scmp.ne.s32.totalorder %s211, %s213
      %p220 = scmp.eq.s32.totalorder %s25, 1
      %p221 = por %p219, %p220
      %p222 = scmp.ne.s32.totalorder %s213, %s214
      %p223 = scmp.eq.s32.totalorder %s25, 0
      %p224 = por %p222, %p223
      %p225 = scmp.ne.s32.totalorder %s213, %s214
      %p226 = scmp.eq.s32.totalorder %s26, 1
      %p227 = por %p225, %p226
      %p229 = scmp.ne.s32.totalorder %s214, %s228
      %p230 = scmp.eq.s32.totalorder %s26, 0
      %p231 = por %p229, %p230
      %s233 = sadd.s32 %s232, 1
      %p236 = scmp.eq.s32.totalorder %s20, 1
      %p237 = scmp.ne.s32.totalorder %s232, %s234
      %p238 = scmp.eq.s32.totalorder %s20, 0
      %p239 = por %p237, %p238
      %p240 = scmp.ne.s32.totalorder %s232, %s234
      %p241 = scmp.eq.s32.totalorder %s25, 1
      %p242 = por %p240, %p241
      %p243 = scmp.ne.s32.totalorder %s234, %s235
      %p244 = scmp.eq.s32.totalorder %s25, 0
      %p245 = por %p243, %p244
      %p246 = scmp.ne.s32.totalorder %s234, %s235
      %p247 = scmp.eq.s32.totalorder %s26, 1
      %p248 = por %p246, %p247
      %p250 = scmp.ne.s32.totalorder %s235, %s249
      %p251 = scmp.eq.s32.totalorder %s26, 0
      %p252 = por %p250, %p251
      %s254 = sadd.s32 %s253, 1
      %p257 = scmp.eq.s32.totalorder %s20, 1
      %p258 = scmp.ne.s32.totalorder %s253, %s255
      %p259 = scmp.eq.s32.totalorder %s20, 0
      %p260 = por %p258, %p259
      %p261 = scmp.ne.s32.totalorder %s253, %s255
      %p262 = scmp.eq.s32.totalorder %s25, 1
      %p263 = por %p261, %p262
      %p264 = scmp.ne.s32.totalorder %s255, %s256
      %p265 = scmp.eq.s32.totalorder %s25, 0
      %p266 = por %p264, %p265
      %p267 = scmp.ne.s32.totalorder %s255, %s256
      %p268 = scmp.eq.s32.totalorder %s26, 1
      %p269 = por %p267, %p268
      %p271 = scmp.ne.s32.totalorder %s256, %s270
      %p272 = scmp.eq.s32.totalorder %s26, 0
      %p273 = por %p271, %p272
      %s274 = ssub.s32 %s20, %s27
      %p275 = scmp.eq.s32.totalorder %s274, 0
      %s277 = sadd.s32 %s276, 1
      %s278 = scalar_select %p275, %s276, %s277
      %p281 = pneg %p275
      %p282 = scmp.eq.s32.totalorder %s20, 1
      %p283 = por %p281, %p282
      %p284 = scmp.ne.s32.totalorder %s276, %s279
      %p285 = scmp.eq.s32.totalorder %s20, 0
      %p286 = por %p284, %p285
      %p287 = scmp.ne.s32.totalorder %s276, %s279
      %p288 = scmp.eq.s32.totalorder %s25, 1
      %p289 = por %p287, %p288
      %p290 = scmp.ne.s32.totalorder %s279, %s280
      %p291 = scmp.eq.s32.totalorder %s25, 0
      %p292 = por %p290, %p291
      %p293 = scmp.ne.s32.totalorder %s279, %s280
      %p294 = scmp.eq.s32.totalorder %s26, 1
      %p295 = por %p293, %p294
      %p297 = scmp.ne.s32.totalorder %s280, %s296
      %p298 = scmp.eq.s32.totalorder %s26, 0
      %p299 = por %p297, %p298
      %p300 = scmp.le.s32.totalorder 1, %s20
      %p301 = scmp.lt.s32.totalorder %s20, 3
      %p302 = pnand %p300, %p301
      %p303 = pneg %p302
      // Predicated region
      $region9: #{tpu_custom_call.1} parent=5 // pred_check
        _
      $region10: #{tpu_custom_call.1} parent=5 // pred_check_branch
        %305 = sbr.rel (%p302) target = $region12
      $region11: #{tpu_custom_call.1} parent=5 // pred_region
        %s306 = ssub.s32 %s20, 1
        // Predicated region
        $region13: #{tpu_custom_call.1} parent=11 // pred_check
          %p307 = pneg %p119
        $region14: #{tpu_custom_call.1} parent=11 // pred_check_branch
          %309 = sbr.rel (%p307) target = $region16
        $region15: #{tpu_custom_call.1} parent=11 // pred_region
          _
        $region16: #{tpu_custom_call.1} parent=11 // pred_fallthru
          _
        // Predicated region
        $region17: #{tpu_custom_call.1} parent=11 // pred_check
          %p310 = pneg %p140
        $region18: #{tpu_custom_call.1} parent=11 // pred_check_branch
          %312 = sbr.rel (%p310) target = $region20
        $region19: #{tpu_custom_call.1} parent=11 // pred_region
          _
        $region20: #{tpu_custom_call.1} parent=11 // pred_fallthru
          _
        // Predicated region
        $region21: #{tpu_custom_call.1} parent=11 // pred_check
          %p313 = pneg %p161
        $region22: #{tpu_custom_call.1} parent=11 // pred_check_branch
          %315 = sbr.rel (%p313) target = $region24
        $region23: #{tpu_custom_call.1} parent=11 // pred_region
          _
        $region24: #{tpu_custom_call.1} parent=11 // pred_fallthru
          _
        // Predicated region
        $region25: #{tpu_custom_call.1} parent=11 // pred_check
          %p316 = pneg %p182
        $region26: #{tpu_custom_call.1} parent=11 // pred_check_branch
          %318 = sbr.rel (%p316) target = $region28
        $region27: #{tpu_custom_call.1} parent=11 // pred_region
          _
        $region28: #{tpu_custom_call.1} parent=11 // pred_fallthru
          _
        // Predicated region
        $region29: #{tpu_custom_call.1} parent=11 // pred_check
          %p319 = pneg %p203
        $region30: #{tpu_custom_call.1} parent=11 // pred_check_branch
          %321 = sbr.rel (%p319) target = $region32
        $region31: #{tpu_custom_call.1} parent=11 // pred_region
          _
        $region32: #{tpu_custom_call.1} parent=11 // pred_fallthru
          _
        // Predicated region
        $region33: #{tpu_custom_call.1} parent=11 // pred_check
          %p322 = pneg %p224
        $region34: #{tpu_custom_call.1} parent=11 // pred_check_branch
          %324 = sbr.rel (%p322) target = $region36
        $region35: #{tpu_custom_call.1} parent=11 // pred_region
          _
        $region36: #{tpu_custom_call.1} parent=11 // pred_fallthru
          _
        // Predicated region
        $region37: #{tpu_custom_call.1} parent=11 // pred_check
          %p325 = pneg %p245
        $region38: #{tpu_custom_call.1} parent=11 // pred_check_branch
          %327 = sbr.rel (%p325) target = $region40
        $region39: #{tpu_custom_call.1} parent=11 // pred_region
          _
        $region40: #{tpu_custom_call.1} parent=11 // pred_fallthru
          _
        // Predicated region
        $region41: #{tpu_custom_call.1} parent=11 // pred_check
          %p328 = pneg %p266
        $region42: #{tpu_custom_call.1} parent=11 // pred_check_branch
          %330 = sbr.rel (%p328) target = $region44
        $region43: #{tpu_custom_call.1} parent=11 // pred_region
          _
        $region44: #{tpu_custom_call.1} parent=11 // pred_fallthru
          _
      $region12: #{tpu_custom_call.1} parent=5 // pred_fallthru
        _
      %p331 = scmp.lt.s32.totalorder %s20, 2
      // Predicated region
      $region45: #{tpu_custom_call.1} parent=5 // pred_check
        %p332 = pneg %p331
      $region46: #{tpu_custom_call.1} parent=5 // pred_check_branch
        %334 = sbr.rel (%p332) target = $region48
      $region47: #{tpu_custom_call.1} parent=5 // pred_region
        // Predicated region
        $region49: #{tpu_custom_call.1} parent=47 // pred_check
          %p335 = pneg %p40
        $region50: #{tpu_custom_call.1} parent=47 // pred_check_branch
          %337 = sbr.rel (%p335) target = $region52
        $region51: #{tpu_custom_call.1} parent=47 // pred_region
          %s338 = smul.u32 8, %s20
          %p339 = scmp.lt.s32.totalorder %s338, 15
          %s340 = scalar_select %p339, %s338, 15
          %s341 = smul.addr %s340, 4
          %s342 = scalar_lea.vmem %s0, %s341
          %s343 = smul.u32 8, %s20
        $region52: #{tpu_custom_call.1} parent=47 // pred_fallthru
          _
        // Predicated region
        $region53: #{tpu_custom_call.1} parent=47 // pred_check
          %p344 = pneg %p66
        $region54: #{tpu_custom_call.1} parent=47 // pred_check_branch
          %346 = sbr.rel (%p344) target = $region56
        $region55: #{tpu_custom_call.1} parent=47 // pred_region
          %s347 = smul.u32 8, %s20
          %p348 = scmp.lt.s32.totalorder %s347, 15
          %s349 = scalar_select %p348, %s347, 15
          %s350 = smul.addr %s349, 4
          %s351 = scalar_lea.vmem %s1, %s350
          %s352 = smul.u32 8, %s20
        $region56: #{tpu_custom_call.1} parent=47 // pred_fallthru
          _
        // Predicated region
        $region57: #{tpu_custom_call.1} parent=47 // pred_check
          %p353 = pneg %p92
        $region58: #{tpu_custom_call.1} parent=47 // pred_check_branch
          %355 = sbr.rel (%p353) target = $region60
        $region59: #{tpu_custom_call.1} parent=47 // pred_region
          %s356 = smul.u32 8, %s20
          %p357 = scmp.lt.s32.totalorder %s356, 15
          %s358 = scalar_select %p357, %s356, 15
          %s359 = smul.addr %s358, 2
          %s360 = scalar_lea.vmem %s2, %s359
          %s361 = smul.u32 8, %s20
        $region60: #{tpu_custom_call.1} parent=47 // pred_fallthru
          _
      $region48: #{tpu_custom_call.1} parent=5 // pred_fallthru
        _
      %p362 = scmp.le.s32.totalorder 1, %s20
      %p363 = scmp.lt.s32.totalorder %s20, 3
      %p364 = pnand %p362, %p363
      %p365 = pneg %p364
      // Predicated region
      $region61: #{tpu_custom_call.1} parent=5 // pred_check
        _
      $region62: #{tpu_custom_call.1} parent=5 // pred_check_branch
        %367 = sbr.rel (%p364) target = $region64
      $region63: #{tpu_custom_call.1} parent=5 // pred_region
        %s368 = ssub.s32 %s20, 1
        %s369 = smul.u32 8, %s25
        %p370 = scmp.lt.s32.totalorder %s369, 15
        %s371 = scalar_select %p370, %s369, 15
        %s372 = smul.addr %s371, 4
        %s373 = scalar_lea.vmem %s0, %s372
        %p374 = pneg %p46
        %p375 = pneg %p43
        %s376 = smul.u32 8, %s25
        %p377 = scmp.lt.s32.totalorder %s376, 15
        %s378 = scalar_select %p377, %s376, 15
        %s379 = smul.addr %s378, 4
        %s380 = scalar_lea.vmem %s1, %s379
        %p381 = pneg %p72
        %p382 = pneg %p69
        %s383 = smul.u32 8, %s25
        %p384 = scmp.lt.s32.totalorder %s383, 15
        %s385 = scalar_select %p384, %s383, 15
        %s386 = smul.addr %s385, 2
        %s387 = scalar_lea.vmem %s2, %s386
        %p388 = pneg %p98
        %p389 = pneg %p95
        %p390 = pneg %p119
        %p391 = pneg %p116
        %p392 = pneg %p140
        %p393 = pneg %p137
        %p394 = pneg %p161
        %p395 = pneg %p158
        %p396 = pneg %p182
        %p397 = pneg %p179
        %p398 = pneg %p203
        %p399 = pneg %p200
        %p400 = pneg %p224
        %p401 = pneg %p221
        %p402 = pneg %p245
        %p403 = pneg %p242
        %p404 = pneg %p266
        %p405 = pneg %p263
        %p406 = pneg %p292
        %p407 = pneg %p289
        %s408 = sand.u32 %s279, 1
        %s409 = scalar_lea.sflag [#allocation3], %s408
        %s410 = sand.u32 %s279, 1
        %s411 = smul.addr %s410, 8
        %s412 = scalar_lea.vmem [#allocation2], %s411
        %s413 = smul.u32 8, %s25
        %p414 = scmp.lt.s32.totalorder %s413, 15
        %s415 = scalar_select %p414, %s413, 15
        %s416 = smul.addr %s415, 4
        %s417 = scalar_lea.vmem %s0, %s416
        %s418 = smul.u32 8, %s25
        %s419 = smul.u32 8, %s25
        %p420 = scmp.lt.s32.totalorder %s419, 15
        %s421 = scalar_select %p420, %s419, 15
        %s422 = smul.addr %s421, 4
        %s423 = scalar_lea.vmem %s1, %s422
        %s424 = smul.u32 8, %s25
        %s425 = smul.u32 8, %s25
        %p426 = scmp.lt.s32.totalorder %s425, 15
        %s427 = scalar_select %p426, %s425, 15
        %s428 = smul.addr %s427, 2
        %s429 = scalar_lea.vmem %s2, %s428
        %s430 = smul.u32 8, %s25
        %v431 = vld [vmem:[%s3] sm:$0xff]
        %v432 = vld [vmem:[%s3 + $0x8] sm:$0xff]
        %v433 = vld [vmem:[%s4] sm:$0x1]
        %v434 = vld [vmem:[%s5] sm:$0xff]
        %v435 = vld [vmem:[%s6] sm:$0x1]
        %v436 = vld [vmem:[%s7] sm:$0xff]
        %v437 = vld [vmem:[%s7 + $0x8] sm:$0xf]
        %v438 = vld [vmem:[%s8] sm:$0x1]
        %v439 = vld [vmem:[%s10] sm:$0x1]
        %v440 = vld [vmem:[%s417] sm:$0x1]
        %v441 = vld [vmem:[%s417 + $0x4] sm:$0x1]
        %v442 = vld [vmem:[%s417 + $0x8] sm:$0x1]
        %v443 = vld [vmem:[%s417 + $0xc] sm:$0x1]
        %v444 = vld [vmem:[%s417 + $0x10] sm:$0x1]
        %v445 = vld [vmem:[%s417 + $0x14] sm:$0x1]
        %v446 = vld [vmem:[%s417 + $0x18] sm:$0x1]
        %v447 = vld [vmem:[%s417 + $0x1c] sm:$0x1]
        %v449 = vlaneseq
        %v450 = vshrl.u32 %v449, 7
        %v451 = vsub.s32 0, %v450
        %v452 = vrot.slane %v433, %v451
        %v462 = vrot.slane %v441, 7
        %vm463 = vcmask 1041409
        %v464 = vsel %vm463, %v462, %v440
        %v465 = vrot.slane %v442, 6
        %vm466 = vcmask 1042434
        %v467 = vsel %vm466, %v465, %v464
        %v468 = vrot.slane %v443, 5
        %vm469 = vcmask 1043459
        %v470 = vsel %vm469, %v468, %v467
        %v471 = vrot.slane %v444, 4
        %vm472 = vcmask 1044484
        %v473 = vsel %vm472, %v471, %v470
        %v474 = vrot.slane %v445, 3
        %vm475 = vcmask 1045509
        %v476 = vsel %vm475, %v474, %v473
        %v477 = vrot.slane %v446, 2
        %vm478 = vcmask 1046534
        %v479 = vsel %vm478, %v477, %v476
        %v480 = vrot.slane %v447, 1
        %vm481 = vcmask 1047559
        %v482 = vsel %vm481, %v480, %v479
        %vm483 = vcmask 130048
        %v484 = vsel %vm483, %v482, 0
        %486 = vmatprep.subr.mxu0 0.0
        %487 = vmatpush1.msra.mxu0 0.0
        %488 = vmatprep.subr.mxu0 0.0
        %489 = vmatpush1.msra.mxu0 0.0
        %490 = vmatprep.subr.mxu0 0.0
        %491 = vmatpush1.msra.mxu0 0.0
        %492 = vmatprep.subr.mxu0 0.0
        %493 = vmatpush1.msra.mxu0 0.0
        %494 = vmatprep.subr.mxu0 0.0
        %495 = vmatpush1.msra.mxu0 0.0
        %496 = vmatprep.subr.mxu0 0.0
        %497 = vmatpush1.msra.mxu0 0.0
        %498 = vmatprep.subr.mxu0 0.0
        %499 = vmatpush1.msra.mxu0 0.0
        %500 = vmatprep.subr.mxu0 0.0
        %501 = vmatpush1.msra.mxu0 0.0
        %502 = vmatprep.subr.mxu0 0.0
        %503 = vmatpush1.msra.mxu0 0.0
        %504 = vmatprep.subr.mxu0 0.0
        %505 = vmatpush1.msra.mxu0 0.0
        %506 = vmatprep.subr.mxu0 0.0
        %507 = vmatpush1.msra.mxu0 0.0
        %508 = vmatprep.subr.mxu0 0.0
        %509 = vmatpush1.msra.mxu0 0.0
        %510 = vmatprep.subr.mxu0 0.0
        %511 = vmatpush1.msra.mxu0 0.0
        %512 = vmatprep.subr.mxu0 0.0
        %513 = vmatpush1.msra.mxu0 0.0
        %514 = vmatprep.subr.mxu0 0.0
        %515 = vmatpush1.msra.mxu0 %v432
        %516 = vmatprep.subr.mxu0 0.0
        %517 = vmatpush1.msra.mxu0 %v431
        %518 = vmatprep.subr.mxu0 0.0
        %519 = vmatpush2.msra.mxu0 0.0
        %520 = vmatprep.subr.mxu0 0.0
        %521 = vmatpush2.msra.mxu0 0.0
        %522 = vmatprep.subr.mxu0 0.0
        %523 = vmatpush2.msra.mxu0 0.0
        %524 = vmatprep.subr.mxu0 0.0
        %525 = vmatpush2.msra.mxu0 0.0
        %526 = vmatprep.subr.mxu0 0.0
        %527 = vmatpush2.msra.mxu0 0.0
        %528 = vmatprep.subr.mxu0 0.0
        %529 = vmatpush2.msra.mxu0 0.0
        %530 = vmatprep.subr.mxu0 0.0
        %531 = vmatpush2.msra.mxu0 0.0
        %532 = vmatprep.subr.mxu0 0.0
        %533 = vmatpush2.msra.mxu0 0.0
        %534 = vmatprep.subr.mxu0 0.0
        %535 = vmatpush2.msra.mxu0 0.0
        %536 = vmatprep.subr.mxu0 0.0
        %537 = vmatpush2.msra.mxu0 0.0
        %538 = vmatprep.subr.mxu0 0.0
        %539 = vmatpush2.msra.mxu0 0.0
        %540 = vmatprep.subr.mxu0 0.0
        %541 = vmatpush2.msra.mxu0 0.0
        %542 = vmatprep.subr.mxu0 0.0
        %543 = vmatpush2.msra.mxu0 0.0
        %544 = vmatprep.subr.mxu0 0.0
        %545 = vmatpush2.msra.mxu0 0.0
        %546 = vmatprep.subr.mxu0 0.0
        %547 = vmatpush2.msra.mxu0 0.0
        %548 = vmatprep.subr.mxu0 0.0
        %549 = vmatpush2.msra.mxu0 0.0
        %550 = vmatprep.mubr.f32.mxu0 0.0
        %551 = vmatmul.mubr.f32.gmra.mxu0 %v484
        %v552 = vpop.f32.mrf.mxu0
        %v553 = vadd.f32 %v452, %v552
        %v554 = vpop.f32.mrf.mxu0
        %555 = vdwg.mxu0
        %v556 = vmax.f32 %v553, 0.0
        %v557 = vld [vmem:[%s9] sm:$0xff]
        %v558 = vld [vmem:[%s9 + $0x8] sm:$0xff]
        %v559 = vld [vmem:[%s9 + $0x10] sm:$0xff]
        %v560 = vld [vmem:[%s9 + $0x18] sm:$0xff]
        %v561 = vld [vmem:[%s417 + $0x1] sm:$0x1]
        %v562 = vld [vmem:[%s417 + $0x5] sm:$0x1]
        %v563 = vld [vmem:[%s417 + $0x9] sm:$0x1]
        %v564 = vld [vmem:[%s417 + $0xd] sm:$0x1]
        %v565 = vld [vmem:[%s417 + $0x11] sm:$0x1]
        %v566 = vld [vmem:[%s417 + $0x15] sm:$0x1]
        %v567 = vld [vmem:[%s417 + $0x19] sm:$0x1]
        %v568 = vld [vmem:[%s417 + $0x1d] sm:$0x1]
        %v577 = vrot.slane %v562, 7
        %v578 = vsel %vm463, %v577, %v561
        %v579 = vrot.slane %v563, 6
        %v580 = vsel %vm466, %v579, %v578
        %v581 = vrot.slane %v564, 5
        %v582 = vsel %vm469, %v581, %v580
        %v583 = vrot.slane %v565, 4
        %v584 = vsel %vm472, %v583, %v582
        %v585 = vrot.slane %v566, 3
        %v586 = vsel %vm475, %v585, %v584
        %v587 = vrot.slane %v567, 2
        %v588 = vsel %vm478, %v587, %v586
        %v589 = vrot.slane %v568, 1
        %v590 = vsel %vm481, %v589, %v588
        %v591 = vsel %vm483, %v590, 0
        %593 = vmatprep.subr.mxu0 0.0
        %594 = vmatpush1.msra.mxu0 0.0
        %595 = vmatprep.subr.mxu0 0.0
        %596 = vmatpush1.msra.mxu0 0.0
        %597 = vmatprep.subr.mxu0 0.0
        %598 = vmatpush1.msra.mxu0 0.0
        %599 = vmatprep.subr.mxu0 0.0
        %600 = vmatpush1.msra.mxu0 0.0
        %601 = vmatprep.subr.mxu0 0.0
        %602 = vmatpush1.msra.mxu0 0.0
        %603 = vmatprep.subr.mxu0 0.0
        %604 = vmatpush1.msra.mxu0 0.0
        %605 = vmatprep.subr.mxu0 0.0
        %606 = vmatpush1.msra.mxu0 0.0
        %607 = vmatprep.subr.mxu0 0.0
        %608 = vmatpush1.msra.mxu0 0.0
        %609 = vmatprep.subr.mxu0 0.0
        %610 = vmatpush1.msra.mxu0 0.0
        %611 = vmatprep.subr.mxu0 0.0
        %612 = vmatpush1.msra.mxu0 0.0
        %613 = vmatprep.subr.mxu0 0.0
        %614 = vmatpush1.msra.mxu0 0.0
        %615 = vmatprep.subr.mxu0 0.0
        %616 = vmatpush1.msra.mxu0 0.0
        %617 = vmatprep.subr.mxu0 0.0
        %618 = vmatpush1.msra.mxu0 0.0
        %619 = vmatprep.subr.mxu0 0.0
        %620 = vmatpush1.msra.mxu0 0.0
        %621 = vmatprep.subr.mxu0 0.0
        %622 = vmatpush1.msra.mxu0 %v432
        %623 = vmatprep.subr.mxu0 0.0
        %624 = vmatpush1.msra.mxu0 %v431
        %625 = vmatprep.subr.mxu0 0.0
        %626 = vmatpush2.msra.mxu0 0.0
        %627 = vmatprep.subr.mxu0 0.0
        %628 = vmatpush2.msra.mxu0 0.0
        %629 = vmatprep.subr.mxu0 0.0
        %630 = vmatpush2.msra.mxu0 0.0
        %631 = vmatprep.subr.mxu0 0.0
        %632 = vmatpush2.msra.mxu0 0.0
        %633 = vmatprep.subr.mxu0 0.0
        %634 = vmatpush2.msra.mxu0 0.0
        %635 = vmatprep.subr.mxu0 0.0
        %636 = vmatpush2.msra.mxu0 0.0
        %637 = vmatprep.subr.mxu0 0.0
        %638 = vmatpush2.msra.mxu0 0.0
        %639 = vmatprep.subr.mxu0 0.0
        %640 = vmatpush2.msra.mxu0 0.0
        %641 = vmatprep.subr.mxu0 0.0
        %642 = vmatpush2.msra.mxu0 0.0
        %643 = vmatprep.subr.mxu0 0.0
        %644 = vmatpush2.msra.mxu0 0.0
        %645 = vmatprep.subr.mxu0 0.0
        %646 = vmatpush2.msra.mxu0 0.0
        %647 = vmatprep.subr.mxu0 0.0
        %648 = vmatpush2.msra.mxu0 0.0
        %649 = vmatprep.subr.mxu0 0.0
        %650 = vmatpush2.msra.mxu0 0.0
        %651 = vmatprep.subr.mxu0 0.0
        %652 = vmatpush2.msra.mxu0 0.0
        %653 = vmatprep.subr.mxu0 0.0
        %654 = vmatpush2.msra.mxu0 0.0
        %655 = vmatprep.subr.mxu0 0.0
        %656 = vmatpush2.msra.mxu0 0.0
        %657 = vmatprep.mubr.f32.mxu0 0.0
        %658 = vmatmul.mubr.f32.gmra.mxu0 %v591
        %v659 = vpop.f32.mrf.mxu0
        %v660 = vadd.f32 %v452, %v659
        %v661 = vpop.f32.mrf.mxu0
        %662 = vdwg.mxu0
        %v663 = vmax.f32 %v660, 0.0
        %v664 = vld [vmem:[%s9 + $0x20] sm:$0xff]
        %v665 = vld [vmem:[%s9 + $0x28] sm:$0xff]
        %v666 = vld [vmem:[%s9 + $0x30] sm:$0xff]
        %v667 = vld [vmem:[%s9 + $0x38] sm:$0xff]
        %vm668 = vcmask 261120
        %v670 = vsel %vm668, %v663, 0
        %672 = vmatprep.subr.mxu0 0.0
        %673 = vmatpush1.msra.mxu0 0.0
        %674 = vmatprep.subr.mxu0 0.0
        %675 = vmatpush1.msra.mxu0 0.0
        %676 = vmatprep.subr.mxu0 0.0
        %677 = vmatpush1.msra.mxu0 0.0
        %678 = vmatprep.subr.mxu0 0.0
        %679 = vmatpush1.msra.mxu0 0.0
        %680 = vmatprep.subr.mxu0 0.0
        %681 = vmatpush1.msra.mxu0 0.0
        %682 = vmatprep.subr.mxu0 0.0
        %683 = vmatpush1.msra.mxu0 0.0
        %684 = vmatprep.subr.mxu0 0.0
        %685 = vmatpush1.msra.mxu0 0.0
        %686 = vmatprep.subr.mxu0 0.0
        %687 = vmatpush1.msra.mxu0 0.0
        %688 = vmatprep.subr.mxu0 0.0
        %689 = vmatpush1.msra.mxu0 0.0
        %690 = vmatprep.subr.mxu0 0.0
        %691 = vmatpush1.msra.mxu0 0.0
        %692 = vmatprep.subr.mxu0 0.0
        %693 = vmatpush1.msra.mxu0 0.0
        %694 = vmatprep.subr.mxu0 0.0
        %695 = vmatpush1.msra.mxu0 0.0
        %696 = vmatprep.subr.mxu0 0.0
        %697 = vmatpush1.msra.mxu0 %v667
        %698 = vmatprep.subr.mxu0 0.0
        %699 = vmatpush1.msra.mxu0 %v666
        %700 = vmatprep.subr.mxu0 0.0
        %701 = vmatpush1.msra.mxu0 %v665
        %702 = vmatprep.subr.mxu0 0.0
        %703 = vmatpush1.msra.mxu0 %v664
        %704 = vmatprep.subr.mxu0 0.0
        %705 = vmatpush2.msra.mxu0 0.0
        %706 = vmatprep.subr.mxu0 0.0
        %707 = vmatpush2.msra.mxu0 0.0
        %708 = vmatprep.subr.mxu0 0.0
        %709 = vmatpush2.msra.mxu0 0.0
        %710 = vmatprep.subr.mxu0 0.0
        %711 = vmatpush2.msra.mxu0 0.0
        %712 = vmatprep.subr.mxu0 0.0
        %713 = vmatpush2.msra.mxu0 0.0
        %714 = vmatprep.subr.mxu0 0.0
        %715 = vmatpush2.msra.mxu0 0.0
        %716 = vmatprep.subr.mxu0 0.0
        %717 = vmatpush2.msra.mxu0 0.0
        %718 = vmatprep.subr.mxu0 0.0
        %719 = vmatpush2.msra.mxu0 0.0
        %720 = vmatprep.subr.mxu0 0.0
        %721 = vmatpush2.msra.mxu0 0.0
        %722 = vmatprep.subr.mxu0 0.0
        %723 = vmatpush2.msra.mxu0 0.0
        %724 = vmatprep.subr.mxu0 0.0
        %725 = vmatpush2.msra.mxu0 0.0
        %726 = vmatprep.subr.mxu0 0.0
        %727 = vmatpush2.msra.mxu0 0.0
        %728 = vmatprep.subr.mxu0 0.0
        %729 = vmatpush2.msra.mxu0 0.0
        %730 = vmatprep.subr.mxu0 0.0
        %731 = vmatpush2.msra.mxu0 0.0
        %732 = vmatprep.subr.mxu0 0.0
        %733 = vmatpush2.msra.mxu0 0.0
        %734 = vmatprep.subr.mxu0 0.0
        %735 = vmatpush2.msra.mxu0 0.0
        %736 = vmatprep.mubr.f32.mxu0 0.0
        %737 = vmatmul.mubr.f32.gmra.mxu0 %v670
        %v738 = vpop.f32.mrf.mxu0
        %v739 = vadd.f32 0.0, %v738
        %v740 = vpop.f32.mrf.mxu0
        %741 = vdwg.mxu0
        %v743 = vsel %vm668, %v556, 0
        %745 = vmatprep.subr.mxu0 0.0
        %746 = vmatpush1.msra.mxu0 0.0
        %747 = vmatprep.subr.mxu0 0.0
        %748 = vmatpush1.msra.mxu0 0.0
        %749 = vmatprep.subr.mxu0 0.0
        %750 = vmatpush1.msra.mxu0 0.0
        %751 = vmatprep.subr.mxu0 0.0
        %752 = vmatpush1.msra.mxu0 0.0
        %753 = vmatprep.subr.mxu0 0.0
        %754 = vmatpush1.msra.mxu0 0.0
        %755 = vmatprep.subr.mxu0 0.0
        %756 = vmatpush1.msra.mxu0 0.0
        %757 = vmatprep.subr.mxu0 0.0
        %758 = vmatpush1.msra.mxu0 0.0
        %759 = vmatprep.subr.mxu0 0.0
        %760 = vmatpush1.msra.mxu0 0.0
        %761 = vmatprep.subr.mxu0 0.0
        %762 = vmatpush1.msra.mxu0 0.0
        %763 = vmatprep.subr.mxu0 0.0
        %764 = vmatpush1.msra.mxu0 0.0
        %765 = vmatprep.subr.mxu0 0.0
        %766 = vmatpush1.msra.mxu0 0.0
        %767 = vmatprep.subr.mxu0 0.0
        %768 = vmatpush1.msra.mxu0 0.0
        %769 = vmatprep.subr.mxu0 0.0
        %770 = vmatpush1.msra.mxu0 %v560
        %771 = vmatprep.subr.mxu0 0.0
        %772 = vmatpush1.msra.mxu0 %v559
        %773 = vmatprep.subr.mxu0 0.0
        %774 = vmatpush1.msra.mxu0 %v558
        %775 = vmatprep.subr.mxu0 0.0
        %776 = vmatpush1.msra.mxu0 %v557
        %777 = vmatprep.subr.mxu0 0.0
        %778 = vmatpush2.msra.mxu0 0.0
        %779 = vmatprep.subr.mxu0 0.0
        %780 = vmatpush2.msra.mxu0 0.0
        %781 = vmatprep.subr.mxu0 0.0
        %782 = vmatpush2.msra.mxu0 0.0
        %783 = vmatprep.subr.mxu0 0.0
        %784 = vmatpush2.msra.mxu0 0.0
        %785 = vmatprep.subr.mxu0 0.0
        %786 = vmatpush2.msra.mxu0 0.0
        %787 = vmatprep.subr.mxu0 0.0
        %788 = vmatpush2.msra.mxu0 0.0
        %789 = vmatprep.subr.mxu0 0.0
        %790 = vmatpush2.msra.mxu0 0.0
        %791 = vmatprep.subr.mxu0 0.0
        %792 = vmatpush2.msra.mxu0 0.0
        %793 = vmatprep.subr.mxu0 0.0
        %794 = vmatpush2.msra.mxu0 0.0
        %795 = vmatprep.subr.mxu0 0.0
        %796 = vmatpush2.msra.mxu0 0.0
        %797 = vmatprep.subr.mxu0 0.0
        %798 = vmatpush2.msra.mxu0 0.0
        %799 = vmatprep.subr.mxu0 0.0
        %800 = vmatpush2.msra.mxu0 0.0
        %801 = vmatprep.subr.mxu0 0.0
        %802 = vmatpush2.msra.mxu0 0.0
        %803 = vmatprep.subr.mxu0 0.0
        %804 = vmatpush2.msra.mxu0 0.0
        %805 = vmatprep.subr.mxu0 0.0
        %806 = vmatpush2.msra.mxu0 0.0
        %807 = vmatprep.subr.mxu0 0.0
        %808 = vmatpush2.msra.mxu0 0.0
        %809 = vmatprep.mubr.f32.mxu0 0.0
        %810 = vmatmul.mubr.f32.gmra.mxu0 %v743
        %v811 = vpop.f32.mrf.mxu0
        %v812 = vadd.f32 %v739, %v811
        %v813 = vpop.f32.mrf.mxu0
        %814 = vdwg.mxu0
        %v815 = vld [vmem:[%s417 + $0x2] sm:$0x1]
        %v816 = vld [vmem:[%s417 + $0x6] sm:$0x1]
        %v817 = vld [vmem:[%s417 + $0xa] sm:$0x1]
        %v818 = vld [vmem:[%s417 + $0xe] sm:$0x1]
        %v819 = vld [vmem:[%s417 + $0x12] sm:$0x1]
        %v820 = vld [vmem:[%s417 + $0x16] sm:$0x1]
        %v821 = vld [vmem:[%s417 + $0x1a] sm:$0x1]
        %v822 = vld [vmem:[%s417 + $0x1e] sm:$0x1]
        %v831 = vrot.slane %v816, 7
        %v832 = vsel %vm463, %v831, %v815
        %v833 = vrot.slane %v817, 6
        %v834 = vsel %vm466, %v833, %v832
        %v835 = vrot.slane %v818, 5
        %v836 = vsel %vm469, %v835, %v834
        %v837 = vrot.slane %v819, 4
        %v838 = vsel %vm472, %v837, %v836
        %v839 = vrot.slane %v820, 3
        %v840 = vsel %vm475, %v839, %v838
        %v841 = vrot.slane %v821, 2
        %v842 = vsel %vm478, %v841, %v840
        %v843 = vrot.slane %v822, 1
        %v844 = vsel %vm481, %v843, %v842
        %v845 = vsel %vm483, %v844, 0
        %847 = vmatprep.subr.mxu0 0.0
        %848 = vmatpush1.msra.mxu0 0.0
        %849 = vmatprep.subr.mxu0 0.0
        %850 = vmatpush1.msra.mxu0 0.0
        %851 = vmatprep.subr.mxu0 0.0
        %852 = vmatpush1.msra.mxu0 0.0
        %853 = vmatprep.subr.mxu0 0.0
        %854 = vmatpush1.msra.mxu0 0.0
        %855 = vmatprep.subr.mxu0 0.0
        %856 = vmatpush1.msra.mxu0 0.0
        %857 = vmatprep.subr.mxu0 0.0
        %858 = vmatpush1.msra.mxu0 0.0
        %859 = vmatprep.subr.mxu0 0.0
        %860 = vmatpush1.msra.mxu0 0.0
        %861 = vmatprep.subr.mxu0 0.0
        %862 = vmatpush1.msra.mxu0 0.0
        %863 = vmatprep.subr.mxu0 0.0
        %864 = vmatpush1.msra.mxu0 0.0
        %865 = vmatprep.subr.mxu0 0.0
        %866 = vmatpush1.msra.mxu0 0.0
        %867 = vmatprep.subr.mxu0 0.0
        %868 = vmatpush1.msra.mxu0 0.0
        %869 = vmatprep.subr.mxu0 0.0
        %870 = vmatpush1.msra.mxu0 0.0
        %871 = vmatprep.subr.mxu0 0.0
        %872 = vmatpush1.msra.mxu0 0.0
        %873 = vmatprep.subr.mxu0 0.0
        %874 = vmatpush1.msra.mxu0 0.0
        %875 = vmatprep.subr.mxu0 0.0
        %876 = vmatpush1.msra.mxu0 %v432
        %877 = vmatprep.subr.mxu0 0.0
        %878 = vmatpush1.msra.mxu0 %v431
        %879 = vmatprep.subr.mxu0 0.0
        %880 = vmatpush2.msra.mxu0 0.0
        %881 = vmatprep.subr.mxu0 0.0
        %882 = vmatpush2.msra.mxu0 0.0
        %883 = vmatprep.subr.mxu0 0.0
        %884 = vmatpush2.msra.mxu0 0.0
        %885 = vmatprep.subr.mxu0 0.0
        %886 = vmatpush2.msra.mxu0 0.0
        %887 = vmatprep.subr.mxu0 0.0
        %888 = vmatpush2.msra.mxu0 0.0
        %889 = vmatprep.subr.mxu0 0.0
        %890 = vmatpush2.msra.mxu0 0.0
        %891 = vmatprep.subr.mxu0 0.0
        %892 = vmatpush2.msra.mxu0 0.0
        %893 = vmatprep.subr.mxu0 0.0
        %894 = vmatpush2.msra.mxu0 0.0
        %895 = vmatprep.subr.mxu0 0.0
        %896 = vmatpush2.msra.mxu0 0.0
        %897 = vmatprep.subr.mxu0 0.0
        %898 = vmatpush2.msra.mxu0 0.0
        %899 = vmatprep.subr.mxu0 0.0
        %900 = vmatpush2.msra.mxu0 0.0
        %901 = vmatprep.subr.mxu0 0.0
        %902 = vmatpush2.msra.mxu0 0.0
        %903 = vmatprep.subr.mxu0 0.0
        %904 = vmatpush2.msra.mxu0 0.0
        %905 = vmatprep.subr.mxu0 0.0
        %906 = vmatpush2.msra.mxu0 0.0
        %907 = vmatprep.subr.mxu0 0.0
        %908 = vmatpush2.msra.mxu0 0.0
        %909 = vmatprep.subr.mxu0 0.0
        %910 = vmatpush2.msra.mxu0 0.0
        %911 = vmatprep.mubr.f32.mxu0 0.0
        %912 = vmatmul.mubr.f32.gmra.mxu0 %v845
        %v913 = vpop.f32.mrf.mxu0
        %v914 = vadd.f32 %v452, %v913
        %v915 = vpop.f32.mrf.mxu0
        %916 = vdwg.mxu0
        %v917 = vmax.f32 %v914, 0.0
        %v918 = vld [vmem:[%s9 + $0x40] sm:$0xff]
        %v919 = vld [vmem:[%s9 + $0x48] sm:$0xff]
        %v920 = vld [vmem:[%s9 + $0x50] sm:$0xff]
        %v921 = vld [vmem:[%s9 + $0x58] sm:$0xff]
        %v923 = vsel %vm668, %v917, 0
        %925 = vmatprep.subr.mxu0 0.0
        %926 = vmatpush1.msra.mxu0 0.0
        %927 = vmatprep.subr.mxu0 0.0
        %928 = vmatpush1.msra.mxu0 0.0
        %929 = vmatprep.subr.mxu0 0.0
        %930 = vmatpush1.msra.mxu0 0.0
        %931 = vmatprep.subr.mxu0 0.0
        %932 = vmatpush1.msra.mxu0 0.0
        %933 = vmatprep.subr.mxu0 0.0
        %934 = vmatpush1.msra.mxu0 0.0
        %935 = vmatprep.subr.mxu0 0.0
        %936 = vmatpush1.msra.mxu0 0.0
        %937 = vmatprep.subr.mxu0 0.0
        %938 = vmatpush1.msra.mxu0 0.0
        %939 = vmatprep.subr.mxu0 0.0
        %940 = vmatpush1.msra.mxu0 0.0
        %941 = vmatprep.subr.mxu0 0.0
        %942 = vmatpush1.msra.mxu0 0.0
        %943 = vmatprep.subr.mxu0 0.0
        %944 = vmatpush1.msra.mxu0 0.0
        %945 = vmatprep.subr.mxu0 0.0
        %946 = vmatpush1.msra.mxu0 0.0
        %947 = vmatprep.subr.mxu0 0.0
        %948 = vmatpush1.msra.mxu0 0.0
        %949 = vmatprep.subr.mxu0 0.0
        %950 = vmatpush1.msra.mxu0 %v921
        %951 = vmatprep.subr.mxu0 0.0
        %952 = vmatpush1.msra.mxu0 %v920
        %953 = vmatprep.subr.mxu0 0.0
        %954 = vmatpush1.msra.mxu0 %v919
        %955 = vmatprep.subr.mxu0 0.0
        %956 = vmatpush1.msra.mxu0 %v918
        %957 = vmatprep.subr.mxu0 0.0
        %958 = vmatpush2.msra.mxu0 0.0
        %959 = vmatprep.subr.mxu0 0.0
        %960 = vmatpush2.msra.mxu0 0.0
        %961 = vmatprep.subr.mxu0 0.0
        %962 = vmatpush2.msra.mxu0 0.0
        %963 = vmatprep.subr.mxu0 0.0
        %964 = vmatpush2.msra.mxu0 0.0
        %965 = vmatprep.subr.mxu0 0.0
        %966 = vmatpush2.msra.mxu0 0.0
        %967 = vmatprep.subr.mxu0 0.0
        %968 = vmatpush2.msra.mxu0 0.0
        %969 = vmatprep.subr.mxu0 0.0
        %970 = vmatpush2.msra.mxu0 0.0
        %971 = vmatprep.subr.mxu0 0.0
        %972 = vmatpush2.msra.mxu0 0.0
        %973 = vmatprep.subr.mxu0 0.0
        %974 = vmatpush2.msra.mxu0 0.0
        %975 = vmatprep.subr.mxu0 0.0
        %976 = vmatpush2.msra.mxu0 0.0
        %977 = vmatprep.subr.mxu0 0.0
        %978 = vmatpush2.msra.mxu0 0.0
        %979 = vmatprep.subr.mxu0 0.0
        %980 = vmatpush2.msra.mxu0 0.0
        %981 = vmatprep.subr.mxu0 0.0
        %982 = vmatpush2.msra.mxu0 0.0
        %983 = vmatprep.subr.mxu0 0.0
        %984 = vmatpush2.msra.mxu0 0.0
        %985 = vmatprep.subr.mxu0 0.0
        %986 = vmatpush2.msra.mxu0 0.0
        %987 = vmatprep.subr.mxu0 0.0
        %988 = vmatpush2.msra.mxu0 0.0
        %989 = vmatprep.mubr.f32.mxu0 0.0
        %990 = vmatmul.mubr.f32.gmra.mxu0 %v923
        %v991 = vpop.f32.mrf.mxu0
        %v992 = vadd.f32 0.0, %v991
        %v993 = vpop.f32.mrf.mxu0
        %994 = vdwg.mxu0
        %v995 = vadd.f32 %v812, %v992
        %v996 = vld [vmem:[%s423] sm:$0x1]
        %v997 = vld [vmem:[%s423 + $0x4] sm:$0x1]
        %v998 = vld [vmem:[%s423 + $0x8] sm:$0x1]
        %v999 = vld [vmem:[%s423 + $0xc] sm:$0x1]
        %v1000 = vld [vmem:[%s423 + $0x10] sm:$0x1]
        %v1001 = vld [vmem:[%s423 + $0x14] sm:$0x1]
        %v1002 = vld [vmem:[%s423 + $0x18] sm:$0x1]
        %v1003 = vld [vmem:[%s423 + $0x1c] sm:$0x1]
        %v1005 = vlaneseq
        %v1006 = vshrl.u32 %v1005, 7
        %v1007 = vsub.s32 0, %v1006
        %v1008 = vrot.slane %v435, %v1007
        %v1018 = vrot.slane %v997, 7
        %v1019 = vsel %vm463, %v1018, %v996
        %v1020 = vrot.slane %v998, 6
        %v1021 = vsel %vm466, %v1020, %v1019
        %v1022 = vrot.slane %v999, 5
        %v1023 = vsel %vm469, %v1022, %v1021
        %v1024 = vrot.slane %v1000, 4
        %v1025 = vsel %vm472, %v1024, %v1023
        %v1026 = vrot.slane %v1001, 3
        %v1027 = vsel %vm475, %v1026, %v1025
        %v1028 = vrot.slane %v1002, 2
        %v1029 = vsel %vm478, %v1028, %v1027
        %v1030 = vrot.slane %v1003, 1
        %v1031 = vsel %vm481, %v1030, %v1029
        %vm1032 = vcmask 64512
        %v1033 = vsel %vm1032, %v1031, 0
        %1035 = vmatprep.subr.mxu0 0.0
        %1036 = vmatpush1.msra.mxu0 0.0
        %1037 = vmatprep.subr.mxu0 0.0
        %1038 = vmatpush1.msra.mxu0 0.0
        %1039 = vmatprep.subr.mxu0 0.0
        %1040 = vmatpush1.msra.mxu0 0.0
        %1041 = vmatprep.subr.mxu0 0.0
        %1042 = vmatpush1.msra.mxu0 0.0
        %1043 = vmatprep.subr.mxu0 0.0
        %1044 = vmatpush1.msra.mxu0 0.0
        %1045 = vmatprep.subr.mxu0 0.0
        %1046 = vmatpush1.msra.mxu0 0.0
        %1047 = vmatprep.subr.mxu0 0.0
        %1048 = vmatpush1.msra.mxu0 0.0
        %1049 = vmatprep.subr.mxu0 0.0
        %1050 = vmatpush1.msra.mxu0 0.0
        %1051 = vmatprep.subr.mxu0 0.0
        %1052 = vmatpush1.msra.mxu0 0.0
        %1053 = vmatprep.subr.mxu0 0.0
        %1054 = vmatpush1.msra.mxu0 0.0
        %1055 = vmatprep.subr.mxu0 0.0
        %1056 = vmatpush1.msra.mxu0 0.0
        %1057 = vmatprep.subr.mxu0 0.0
        %1058 = vmatpush1.msra.mxu0 0.0
        %1059 = vmatprep.subr.mxu0 0.0
        %1060 = vmatpush1.msra.mxu0 0.0
        %1061 = vmatprep.subr.mxu0 0.0
        %1062 = vmatpush1.msra.mxu0 0.0
        %1063 = vmatprep.subr.mxu0 0.0
        %1064 = vmatpush1.msra.mxu0 0.0
        %1065 = vmatprep.subr.mxu0 0.0
        %1066 = vmatpush1.msra.mxu0 %v434
        %1067 = vmatprep.subr.mxu0 0.0
        %1068 = vmatpush2.msra.mxu0 0.0
        %1069 = vmatprep.subr.mxu0 0.0
        %1070 = vmatpush2.msra.mxu0 0.0
        %1071 = vmatprep.subr.mxu0 0.0
        %1072 = vmatpush2.msra.mxu0 0.0
        %1073 = vmatprep.subr.mxu0 0.0
        %1074 = vmatpush2.msra.mxu0 0.0
        %1075 = vmatprep.subr.mxu0 0.0
        %1076 = vmatpush2.msra.mxu0 0.0
        %1077 = vmatprep.subr.mxu0 0.0
        %1078 = vmatpush2.msra.mxu0 0.0
        %1079 = vmatprep.subr.mxu0 0.0
        %1080 = vmatpush2.msra.mxu0 0.0
        %1081 = vmatprep.subr.mxu0 0.0
        %1082 = vmatpush2.msra.mxu0 0.0
        %1083 = vmatprep.subr.mxu0 0.0
        %1084 = vmatpush2.msra.mxu0 0.0
        %1085 = vmatprep.subr.mxu0 0.0
        %1086 = vmatpush2.msra.mxu0 0.0
        %1087 = vmatprep.subr.mxu0 0.0
        %1088 = vmatpush2.msra.mxu0 0.0
        %1089 = vmatprep.subr.mxu0 0.0
        %1090 = vmatpush2.msra.mxu0 0.0
        %1091 = vmatprep.subr.mxu0 0.0
        %1092 = vmatpush2.msra.mxu0 0.0
        %1093 = vmatprep.subr.mxu0 0.0
        %1094 = vmatpush2.msra.mxu0 0.0
        %1095 = vmatprep.subr.mxu0 0.0
        %1096 = vmatpush2.msra.mxu0 0.0
        %1097 = vmatprep.subr.mxu0 0.0
        %1098 = vmatpush2.msra.mxu0 0.0
        %1099 = vmatprep.mubr.f32.mxu0 0.0
        %1100 = vmatmul.mubr.f32.gmra.mxu0 %v1033
        %v1101 = vpop.f32.mrf.mxu0
        %v1102 = vadd.f32 %v1008, %v1101
        %v1103 = vpop.f32.mrf.mxu0
        %1104 = vdwg.mxu0
        %v1105 = vmax.f32 %v1102, 0.0
        %v1106 = vld [vmem:[%s9 + $0x60] sm:$0xff]
        %v1107 = vld [vmem:[%s9 + $0x68] sm:$0xff]
        %v1109 = vsel %vm483, %v1105, 0
        %1111 = vmatprep.subr.mxu0 0.0
        %1112 = vmatpush1.msra.mxu0 0.0
        %1113 = vmatprep.subr.mxu0 0.0
        %1114 = vmatpush1.msra.mxu0 0.0
        %1115 = vmatprep.subr.mxu0 0.0
        %1116 = vmatpush1.msra.mxu0 0.0
        %1117 = vmatprep.subr.mxu0 0.0
        %1118 = vmatpush1.msra.mxu0 0.0
        %1119 = vmatprep.subr.mxu0 0.0
        %1120 = vmatpush1.msra.mxu0 0.0
        %1121 = vmatprep.subr.mxu0 0.0
        %1122 = vmatpush1.msra.mxu0 0.0
        %1123 = vmatprep.subr.mxu0 0.0
        %1124 = vmatpush1.msra.mxu0 0.0
        %1125 = vmatprep.subr.mxu0 0.0
        %1126 = vmatpush1.msra.mxu0 0.0
        %1127 = vmatprep.subr.mxu0 0.0
        %1128 = vmatpush1.msra.mxu0 0.0
        %1129 = vmatprep.subr.mxu0 0.0
        %1130 = vmatpush1.msra.mxu0 0.0
        %1131 = vmatprep.subr.mxu0 0.0
        %1132 = vmatpush1.msra.mxu0 0.0
        %1133 = vmatprep.subr.mxu0 0.0
        %1134 = vmatpush1.msra.mxu0 0.0
        %1135 = vmatprep.subr.mxu0 0.0
        %1136 = vmatpush1.msra.mxu0 0.0
        %1137 = vmatprep.subr.mxu0 0.0
        %1138 = vmatpush1.msra.mxu0 0.0
        %1139 = vmatprep.subr.mxu0 0.0
        %1140 = vmatpush1.msra.mxu0 %v1107
        %1141 = vmatprep.subr.mxu0 0.0
        %1142 = vmatpush1.msra.mxu0 %v1106
        %1143 = vmatprep.subr.mxu0 0.0
        %1144 = vmatpush2.msra.mxu0 0.0
        %1145 = vmatprep.subr.mxu0 0.0
        %1146 = vmatpush2.msra.mxu0 0.0
        %1147 = vmatprep.subr.mxu0 0.0
        %1148 = vmatpush2.msra.mxu0 0.0
        %1149 = vmatprep.subr.mxu0 0.0
        %1150 = vmatpush2.msra.mxu0 0.0
        %1151 = vmatprep.subr.mxu0 0.0
        %1152 = vmatpush2.msra.mxu0 0.0
        %1153 = vmatprep.subr.mxu0 0.0
        %1154 = vmatpush2.msra.mxu0 0.0
        %1155 = vmatprep.subr.mxu0 0.0
        %1156 = vmatpush2.msra.mxu0 0.0
        %1157 = vmatprep.subr.mxu0 0.0
        %1158 = vmatpush2.msra.mxu0 0.0
        %1159 = vmatprep.subr.mxu0 0.0
        %1160 = vmatpush2.msra.mxu0 0.0
        %1161 = vmatprep.subr.mxu0 0.0
        %1162 = vmatpush2.msra.mxu0 0.0
        %1163 = vmatprep.subr.mxu0 0.0
        %1164 = vmatpush2.msra.mxu0 0.0
        %1165 = vmatprep.subr.mxu0 0.0
        %1166 = vmatpush2.msra.mxu0 0.0
        %1167 = vmatprep.subr.mxu0 0.0
        %1168 = vmatpush2.msra.mxu0 0.0
        %1169 = vmatprep.subr.mxu0 0.0
        %1170 = vmatpush2.msra.mxu0 0.0
        %1171 = vmatprep.subr.mxu0 0.0
        %1172 = vmatpush2.msra.mxu0 0.0
        %1173 = vmatprep.subr.mxu0 0.0
        %1174 = vmatpush2.msra.mxu0 0.0
        %1175 = vmatprep.mubr.f32.mxu0 0.0
        %1176 = vmatmul.mubr.f32.gmra.mxu0 %v1109
        %v1177 = vpop.f32.mrf.mxu0
        %v1178 = vadd.f32 0.0, %v1177
        %v1179 = vpop.f32.mrf.mxu0
        %1180 = vdwg.mxu0
        %v1181 = vadd.f32 %v995, %v1178
        %v1182 = vld [vmem:[%s423 + $0x1] sm:$0x1]
        %v1183 = vld [vmem:[%s423 + $0x5] sm:$0x1]
        %v1184 = vld [vmem:[%s423 + $0x9] sm:$0x1]
        %v1185 = vld [vmem:[%s423 + $0xd] sm:$0x1]
        %v1186 = vld [vmem:[%s423 + $0x11] sm:$0x1]
        %v1187 = vld [vmem:[%s423 + $0x15] sm:$0x1]
        %v1188 = vld [vmem:[%s423 + $0x19] sm:$0x1]
        %v1189 = vld [vmem:[%s423 + $0x1d] sm:$0x1]
        %v1198 = vrot.slane %v1183, 7
        %v1199 = vsel %vm463, %v1198, %v1182
        %v1200 = vrot.slane %v1184, 6
        %v1201 = vsel %vm466, %v1200, %v1199
        %v1202 = vrot.slane %v1185, 5
        %v1203 = vsel %vm469, %v1202, %v1201
        %v1204 = vrot.slane %v1186, 4
        %v1205 = vsel %vm472, %v1204, %v1203
        %v1206 = vrot.slane %v1187, 3
        %v1207 = vsel %vm475, %v1206, %v1205
        %v1208 = vrot.slane %v1188, 2
        %v1209 = vsel %vm478, %v1208, %v1207
        %v1210 = vrot.slane %v1189, 1
        %v1211 = vsel %vm481, %v1210, %v1209
        %v1212 = vsel %vm1032, %v1211, 0
        %1214 = vmatprep.subr.mxu0 0.0
        %1215 = vmatpush1.msra.mxu0 0.0
        %1216 = vmatprep.subr.mxu0 0.0
        %1217 = vmatpush1.msra.mxu0 0.0
        %1218 = vmatprep.subr.mxu0 0.0
        %1219 = vmatpush1.msra.mxu0 0.0
        %1220 = vmatprep.subr.mxu0 0.0
        %1221 = vmatpush1.msra.mxu0 0.0
        %1222 = vmatprep.subr.mxu0 0.0
        %1223 = vmatpush1.msra.mxu0 0.0
        %1224 = vmatprep.subr.mxu0 0.0
        %1225 = vmatpush1.msra.mxu0 0.0
        %1226 = vmatprep.subr.mxu0 0.0
        %1227 = vmatpush1.msra.mxu0 0.0
        %1228 = vmatprep.subr.mxu0 0.0
        %1229 = vmatpush1.msra.mxu0 0.0
        %1230 = vmatprep.subr.mxu0 0.0
        %1231 = vmatpush1.msra.mxu0 0.0
        %1232 = vmatprep.subr.mxu0 0.0
        %1233 = vmatpush1.msra.mxu0 0.0
        %1234 = vmatprep.subr.mxu0 0.0
        %1235 = vmatpush1.msra.mxu0 0.0
        %1236 = vmatprep.subr.mxu0 0.0
        %1237 = vmatpush1.msra.mxu0 0.0
        %1238 = vmatprep.subr.mxu0 0.0
        %1239 = vmatpush1.msra.mxu0 0.0
        %1240 = vmatprep.subr.mxu0 0.0
        %1241 = vmatpush1.msra.mxu0 0.0
        %1242 = vmatprep.subr.mxu0 0.0
        %1243 = vmatpush1.msra.mxu0 0.0
        %1244 = vmatprep.subr.mxu0 0.0
        %1245 = vmatpush1.msra.mxu0 %v434
        %1246 = vmatprep.subr.mxu0 0.0
        %1247 = vmatpush2.msra.mxu0 0.0
        %1248 = vmatprep.subr.mxu0 0.0
        %1249 = vmatpush2.msra.mxu0 0.0
        %1250 = vmatprep.subr.mxu0 0.0
        %1251 = vmatpush2.msra.mxu0 0.0
        %1252 = vmatprep.subr.mxu0 0.0
        %1253 = vmatpush2.msra.mxu0 0.0
        %1254 = vmatprep.subr.mxu0 0.0
        %1255 = vmatpush2.msra.mxu0 0.0
        %1256 = vmatprep.subr.mxu0 0.0
        %1257 = vmatpush2.msra.mxu0 0.0
        %1258 = vmatprep.subr.mxu0 0.0
        %1259 = vmatpush2.msra.mxu0 0.0
        %1260 = vmatprep.subr.mxu0 0.0
        %1261 = vmatpush2.msra.mxu0 0.0
        %1262 = vmatprep.subr.mxu0 0.0
        %1263 = vmatpush2.msra.mxu0 0.0
        %1264 = vmatprep.subr.mxu0 0.0
        %1265 = vmatpush2.msra.mxu0 0.0
        %1266 = vmatprep.subr.mxu0 0.0
        %1267 = vmatpush2.msra.mxu0 0.0
        %1268 = vmatprep.subr.mxu0 0.0
        %1269 = vmatpush2.msra.mxu0 0.0
        %1270 = vmatprep.subr.mxu0 0.0
        %1271 = vmatpush2.msra.mxu0 0.0
        %1272 = vmatprep.subr.mxu0 0.0
        %1273 = vmatpush2.msra.mxu0 0.0
        %1274 = vmatprep.subr.mxu0 0.0
        %1275 = vmatpush2.msra.mxu0 0.0
        %1276 = vmatprep.subr.mxu0 0.0
        %1277 = vmatpush2.msra.mxu0 0.0
        %1278 = vmatprep.mubr.f32.mxu0 0.0
        %1279 = vmatmul.mubr.f32.gmra.mxu0 %v1212
        %v1280 = vpop.f32.mrf.mxu0
        %v1281 = vadd.f32 %v1008, %v1280
        %v1282 = vpop.f32.mrf.mxu0
        %1283 = vdwg.mxu0
        %v1284 = vmax.f32 %v1281, 0.0
        %v1285 = vld [vmem:[%s9 + $0x70] sm:$0xff]
        %v1286 = vld [vmem:[%s9 + $0x78] sm:$0xff]
        %v1288 = vsel %vm483, %v1284, 0
        %1290 = vmatprep.subr.mxu0 0.0
        %1291 = vmatpush1.msra.mxu0 0.0
        %1292 = vmatprep.subr.mxu0 0.0
        %1293 = vmatpush1.msra.mxu0 0.0
        %1294 = vmatprep.subr.mxu0 0.0
        %1295 = vmatpush1.msra.mxu0 0.0
        %1296 = vmatprep.subr.mxu0 0.0
        %1297 = vmatpush1.msra.mxu0 0.0
        %1298 = vmatprep.subr.mxu0 0.0
        %1299 = vmatpush1.msra.mxu0 0.0
        %1300 = vmatprep.subr.mxu0 0.0
        %1301 = vmatpush1.msra.mxu0 0.0
        %1302 = vmatprep.subr.mxu0 0.0
        %1303 = vmatpush1.msra.mxu0 0.0
        %1304 = vmatprep.subr.mxu0 0.0
        %1305 = vmatpush1.msra.mxu0 0.0
        %1306 = vmatprep.subr.mxu0 0.0
        %1307 = vmatpush1.msra.mxu0 0.0
        %1308 = vmatprep.subr.mxu0 0.0
        %1309 = vmatpush1.msra.mxu0 0.0
        %1310 = vmatprep.subr.mxu0 0.0
        %1311 = vmatpush1.msra.mxu0 0.0
        %1312 = vmatprep.subr.mxu0 0.0
        %1313 = vmatpush1.msra.mxu0 0.0
        %1314 = vmatprep.subr.mxu0 0.0
        %1315 = vmatpush1.msra.mxu0 0.0
        %1316 = vmatprep.subr.mxu0 0.0
        %1317 = vmatpush1.msra.mxu0 0.0
        %1318 = vmatprep.subr.mxu0 0.0
        %1319 = vmatpush1.msra.mxu0 %v1286
        %1320 = vmatprep.subr.mxu0 0.0
        %1321 = vmatpush1.msra.mxu0 %v1285
        %1322 = vmatprep.subr.mxu0 0.0
        %1323 = vmatpush2.msra.mxu0 0.0
        %1324 = vmatprep.subr.mxu0 0.0
        %1325 = vmatpush2.msra.mxu0 0.0
        %1326 = vmatprep.subr.mxu0 0.0
        %1327 = vmatpush2.msra.mxu0 0.0
        %1328 = vmatprep.subr.mxu0 0.0
        %1329 = vmatpush2.msra.mxu0 0.0
        %1330 = vmatprep.subr.mxu0 0.0
        %1331 = vmatpush2.msra.mxu0 0.0
        %1332 = vmatprep.subr.mxu0 0.0
        %1333 = vmatpush2.msra.mxu0 0.0
        %1334 = vmatprep.subr.mxu0 0.0
        %1335 = vmatpush2.msra.mxu0 0.0
        %1336 = vmatprep.subr.mxu0 0.0
        %1337 = vmatpush2.msra.mxu0 0.0
        %1338 = vmatprep.subr.mxu0 0.0
        %1339 = vmatpush2.msra.mxu0 0.0
        %1340 = vmatprep.subr.mxu0 0.0
        %1341 = vmatpush2.msra.mxu0 0.0
        %1342 = vmatprep.subr.mxu0 0.0
        %1343 = vmatpush2.msra.mxu0 0.0
        %1344 = vmatprep.subr.mxu0 0.0
        %1345 = vmatpush2.msra.mxu0 0.0
        %1346 = vmatprep.subr.mxu0 0.0
        %1347 = vmatpush2.msra.mxu0 0.0
        %1348 = vmatprep.subr.mxu0 0.0
        %1349 = vmatpush2.msra.mxu0 0.0
        %1350 = vmatprep.subr.mxu0 0.0
        %1351 = vmatpush2.msra.mxu0 0.0
        %1352 = vmatprep.subr.mxu0 0.0
        %1353 = vmatpush2.msra.mxu0 0.0
        %1354 = vmatprep.mubr.f32.mxu0 0.0
        %1355 = vmatmul.mubr.f32.gmra.mxu0 %v1288
        %v1356 = vpop.f32.mrf.mxu0
        %v1357 = vadd.f32 0.0, %v1356
        %v1358 = vpop.f32.mrf.mxu0
        %1359 = vdwg.mxu0
        %v1360 = vadd.f32 %v1181, %v1357
        %v1361 = vld [vmem:[%s423 + $0x2] sm:$0x1]
        %v1362 = vld [vmem:[%s423 + $0x6] sm:$0x1]
        %v1363 = vld [vmem:[%s423 + $0xa] sm:$0x1]
        %v1364 = vld [vmem:[%s423 + $0xe] sm:$0x1]
        %v1365 = vld [vmem:[%s423 + $0x12] sm:$0x1]
        %v1366 = vld [vmem:[%s423 + $0x16] sm:$0x1]
        %v1367 = vld [vmem:[%s423 + $0x1a] sm:$0x1]
        %v1368 = vld [vmem:[%s423 + $0x1e] sm:$0x1]
        %v1377 = vrot.slane %v1362, 7
        %v1378 = vsel %vm463, %v1377, %v1361
        %v1379 = vrot.slane %v1363, 6
        %v1380 = vsel %vm466, %v1379, %v1378
        %v1381 = vrot.slane %v1364, 5
        %v1382 = vsel %vm469, %v1381, %v1380
        %v1383 = vrot.slane %v1365, 4
        %v1384 = vsel %vm472, %v1383, %v1382
        %v1385 = vrot.slane %v1366, 3
        %v1386 = vsel %vm475, %v1385, %v1384
        %v1387 = vrot.slane %v1367, 2
        %v1388 = vsel %vm478, %v1387, %v1386
        %v1389 = vrot.slane %v1368, 1
        %v1390 = vsel %vm481, %v1389, %v1388
        %v1391 = vsel %vm1032, %v1390, 0
        %1393 = vmatprep.subr.mxu0 0.0
        %1394 = vmatpush1.msra.mxu0 0.0
        %1395 = vmatprep.subr.mxu0 0.0
        %1396 = vmatpush1.msra.mxu0 0.0
        %1397 = vmatprep.subr.mxu0 0.0
        %1398 = vmatpush1.msra.mxu0 0.0
        %1399 = vmatprep.subr.mxu0 0.0
        %1400 = vmatpush1.msra.mxu0 0.0
        %1401 = vmatprep.subr.mxu0 0.0
        %1402 = vmatpush1.msra.mxu0 0.0
        %1403 = vmatprep.subr.mxu0 0.0
        %1404 = vmatpush1.msra.mxu0 0.0
        %1405 = vmatprep.subr.mxu0 0.0
        %1406 = vmatpush1.msra.mxu0 0.0
        %1407 = vmatprep.subr.mxu0 0.0
        %1408 = vmatpush1.msra.mxu0 0.0
        %1409 = vmatprep.subr.mxu0 0.0
        %1410 = vmatpush1.msra.mxu0 0.0
        %1411 = vmatprep.subr.mxu0 0.0
        %1412 = vmatpush1.msra.mxu0 0.0
        %1413 = vmatprep.subr.mxu0 0.0
        %1414 = vmatpush1.msra.mxu0 0.0
        %1415 = vmatprep.subr.mxu0 0.0
        %1416 = vmatpush1.msra.mxu0 0.0
        %1417 = vmatprep.subr.mxu0 0.0
        %1418 = vmatpush1.msra.mxu0 0.0
        %1419 = vmatprep.subr.mxu0 0.0
        %1420 = vmatpush1.msra.mxu0 0.0
        %1421 = vmatprep.subr.mxu0 0.0
        %1422 = vmatpush1.msra.mxu0 0.0
        %1423 = vmatprep.subr.mxu0 0.0
        %1424 = vmatpush1.msra.mxu0 %v434
        %1425 = vmatprep.subr.mxu0 0.0
        %1426 = vmatpush2.msra.mxu0 0.0
        %1427 = vmatprep.subr.mxu0 0.0
        %1428 = vmatpush2.msra.mxu0 0.0
        %1429 = vmatprep.subr.mxu0 0.0
        %1430 = vmatpush2.msra.mxu0 0.0
        %1431 = vmatprep.subr.mxu0 0.0
        %1432 = vmatpush2.msra.mxu0 0.0
        %1433 = vmatprep.subr.mxu0 0.0
        %1434 = vmatpush2.msra.mxu0 0.0
        %1435 = vmatprep.subr.mxu0 0.0
        %1436 = vmatpush2.msra.mxu0 0.0
        %1437 = vmatprep.subr.mxu0 0.0
        %1438 = vmatpush2.msra.mxu0 0.0
        %1439 = vmatprep.subr.mxu0 0.0
        %1440 = vmatpush2.msra.mxu0 0.0
        %1441 = vmatprep.subr.mxu0 0.0
        %1442 = vmatpush2.msra.mxu0 0.0
        %1443 = vmatprep.subr.mxu0 0.0
        %1444 = vmatpush2.msra.mxu0 0.0
        %1445 = vmatprep.subr.mxu0 0.0
        %1446 = vmatpush2.msra.mxu0 0.0
        %1447 = vmatprep.subr.mxu0 0.0
        %1448 = vmatpush2.msra.mxu0 0.0
        %1449 = vmatprep.subr.mxu0 0.0
        %1450 = vmatpush2.msra.mxu0 0.0
        %1451 = vmatprep.subr.mxu0 0.0
        %1452 = vmatpush2.msra.mxu0 0.0
        %1453 = vmatprep.subr.mxu0 0.0
        %1454 = vmatpush2.msra.mxu0 0.0
        %1455 = vmatprep.subr.mxu0 0.0
        %1456 = vmatpush2.msra.mxu0 0.0
        %1457 = vmatprep.mubr.f32.mxu0 0.0
        %1458 = vmatmul.mubr.f32.gmra.mxu0 %v1391
        %v1459 = vpop.f32.mrf.mxu0
        %v1460 = vadd.f32 %v1008, %v1459
        %v1461 = vpop.f32.mrf.mxu0
        %1462 = vdwg.mxu0
        %v1463 = vmax.f32 %v1460, 0.0
        %v1464 = vld [vmem:[%s9 + $0x80] sm:$0xff]
        %v1465 = vld [vmem:[%s9 + $0x88] sm:$0xff]
        %v1467 = vsel %vm483, %v1463, 0
        %1469 = vmatprep.subr.mxu0 0.0
        %1470 = vmatpush1.msra.mxu0 0.0
        %1471 = vmatprep.subr.mxu0 0.0
        %1472 = vmatpush1.msra.mxu0 0.0
        %1473 = vmatprep.subr.mxu0 0.0
        %1474 = vmatpush1.msra.mxu0 0.0
        %1475 = vmatprep.subr.mxu0 0.0
        %1476 = vmatpush1.msra.mxu0 0.0
        %1477 = vmatprep.subr.mxu0 0.0
        %1478 = vmatpush1.msra.mxu0 0.0
        %1479 = vmatprep.subr.mxu0 0.0
        %1480 = vmatpush1.msra.mxu0 0.0
        %1481 = vmatprep.subr.mxu0 0.0
        %1482 = vmatpush1.msra.mxu0 0.0
        %1483 = vmatprep.subr.mxu0 0.0
        %1484 = vmatpush1.msra.mxu0 0.0
        %1485 = vmatprep.subr.mxu0 0.0
        %1486 = vmatpush1.msra.mxu0 0.0
        %1487 = vmatprep.subr.mxu0 0.0
        %1488 = vmatpush1.msra.mxu0 0.0
        %1489 = vmatprep.subr.mxu0 0.0
        %1490 = vmatpush1.msra.mxu0 0.0
        %1491 = vmatprep.subr.mxu0 0.0
        %1492 = vmatpush1.msra.mxu0 0.0
        %1493 = vmatprep.subr.mxu0 0.0
        %1494 = vmatpush1.msra.mxu0 0.0
        %1495 = vmatprep.subr.mxu0 0.0
        %1496 = vmatpush1.msra.mxu0 0.0
        %1497 = vmatprep.subr.mxu0 0.0
        %1498 = vmatpush1.msra.mxu0 %v1465
        %1499 = vmatprep.subr.mxu0 0.0
        %1500 = vmatpush1.msra.mxu0 %v1464
        %1501 = vmatprep.subr.mxu0 0.0
        %1502 = vmatpush2.msra.mxu0 0.0
        %1503 = vmatprep.subr.mxu0 0.0
        %1504 = vmatpush2.msra.mxu0 0.0
        %1505 = vmatprep.subr.mxu0 0.0
        %1506 = vmatpush2.msra.mxu0 0.0
        %1507 = vmatprep.subr.mxu0 0.0
        %1508 = vmatpush2.msra.mxu0 0.0
        %1509 = vmatprep.subr.mxu0 0.0
        %1510 = vmatpush2.msra.mxu0 0.0
        %1511 = vmatprep.subr.mxu0 0.0
        %1512 = vmatpush2.msra.mxu0 0.0
        %1513 = vmatprep.subr.mxu0 0.0
        %1514 = vmatpush2.msra.mxu0 0.0
        %1515 = vmatprep.subr.mxu0 0.0
        %1516 = vmatpush2.msra.mxu0 0.0
        %1517 = vmatprep.subr.mxu0 0.0
        %1518 = vmatpush2.msra.mxu0 0.0
        %1519 = vmatprep.subr.mxu0 0.0
        %1520 = vmatpush2.msra.mxu0 0.0
        %1521 = vmatprep.subr.mxu0 0.0
        %1522 = vmatpush2.msra.mxu0 0.0
        %1523 = vmatprep.subr.mxu0 0.0
        %1524 = vmatpush2.msra.mxu0 0.0
        %1525 = vmatprep.subr.mxu0 0.0
        %1526 = vmatpush2.msra.mxu0 0.0
        %1527 = vmatprep.subr.mxu0 0.0
        %1528 = vmatpush2.msra.mxu0 0.0
        %1529 = vmatprep.subr.mxu0 0.0
        %1530 = vmatpush2.msra.mxu0 0.0
        %1531 = vmatprep.subr.mxu0 0.0
        %1532 = vmatpush2.msra.mxu0 0.0
        %1533 = vmatprep.mubr.f32.mxu0 0.0
        %1534 = vmatmul.mubr.f32.gmra.mxu0 %v1467
        %v1535 = vpop.f32.mrf.mxu0
        %v1536 = vadd.f32 0.0, %v1535
        %v1537 = vpop.f32.mrf.mxu0
        %1538 = vdwg.mxu0
        %v1539 = vadd.f32 %v1360, %v1536
        %v1540 = vld [vmem:[%s429] sm:$0x1]
        %v1541 = vld [vmem:[%s429 + $0x2] sm:$0x1]
        %v1542 = vld [vmem:[%s429 + $0x4] sm:$0x1]
        %v1543 = vld [vmem:[%s429 + $0x6] sm:$0x1]
        %v1544 = vld [vmem:[%s429 + $0x8] sm:$0x1]
        %v1545 = vld [vmem:[%s429 + $0xa] sm:$0x1]
        %v1546 = vld [vmem:[%s429 + $0xc] sm:$0x1]
        %v1547 = vld [vmem:[%s429 + $0xe] sm:$0x1]
        %v1549 = vlaneseq
        %v1550 = vshrl.u32 %v1549, 7
        %v1551 = vsub.s32 0, %v1550
        %v1552 = vrot.slane %v438, %v1551
        %v1562 = vrot.slane %v1541, 7
        %v1563 = vsel %vm463, %v1562, %v1540
        %v1564 = vrot.slane %v1542, 6
        %v1565 = vsel %vm466, %v1564, %v1563
        %v1566 = vrot.slane %v1543, 5
        %v1567 = vsel %vm469, %v1566, %v1565
        %v1568 = vrot.slane %v1544, 4
        %v1569 = vsel %vm472, %v1568, %v1567
        %v1570 = vrot.slane %v1545, 3
        %v1571 = vsel %vm475, %v1570, %v1569
        %v1572 = vrot.slane %v1546, 2
        %v1573 = vsel %vm478, %v1572, %v1571
        %v1574 = vrot.slane %v1547, 1
        %v1575 = vsel %vm481, %v1574, %v1573
        %vm1576 = vcmask 97280
        %v1577 = vsel %vm1576, %v1575, 0
        %vm1579 = vcmask 1043456
        %v1581 = vsel %vm1579, %v437, 0
        %1583 = vmatprep.subr.mxu0 0.0
        %1584 = vmatpush1.msra.mxu0 0.0
        %1585 = vmatprep.subr.mxu0 0.0
        %1586 = vmatpush1.msra.mxu0 0.0
        %1587 = vmatprep.subr.mxu0 0.0
        %1588 = vmatpush1.msra.mxu0 0.0
        %1589 = vmatprep.subr.mxu0 0.0
        %1590 = vmatpush1.msra.mxu0 0.0
        %1591 = vmatprep.subr.mxu0 0.0
        %1592 = vmatpush1.msra.mxu0 0.0
        %1593 = vmatprep.subr.mxu0 0.0
        %1594 = vmatpush1.msra.mxu0 0.0
        %1595 = vmatprep.subr.mxu0 0.0
        %1596 = vmatpush1.msra.mxu0 0.0
        %1597 = vmatprep.subr.mxu0 0.0
        %1598 = vmatpush1.msra.mxu0 0.0
        %1599 = vmatprep.subr.mxu0 0.0
        %1600 = vmatpush1.msra.mxu0 0.0
        %1601 = vmatprep.subr.mxu0 0.0
        %1602 = vmatpush1.msra.mxu0 0.0
        %1603 = vmatprep.subr.mxu0 0.0
        %1604 = vmatpush1.msra.mxu0 0.0
        %1605 = vmatprep.subr.mxu0 0.0
        %1606 = vmatpush1.msra.mxu0 0.0
        %1607 = vmatprep.subr.mxu0 0.0
        %1608 = vmatpush1.msra.mxu0 0.0
        %1609 = vmatprep.subr.mxu0 0.0
        %1610 = vmatpush1.msra.mxu0 0.0
        %1611 = vmatprep.subr.mxu0 0.0
        %1612 = vmatpush1.msra.mxu0 %v1581
        %1613 = vmatprep.subr.mxu0 0.0
        %1614 = vmatpush1.msra.mxu0 %v436
        %1615 = vmatprep.subr.mxu0 0.0
        %1616 = vmatpush2.msra.mxu0 0.0
        %1617 = vmatprep.subr.mxu0 0.0
        %1618 = vmatpush2.msra.mxu0 0.0
        %1619 = vmatprep.subr.mxu0 0.0
        %1620 = vmatpush2.msra.mxu0 0.0
        %1621 = vmatprep.subr.mxu0 0.0
        %1622 = vmatpush2.msra.mxu0 0.0
        %1623 = vmatprep.subr.mxu0 0.0
        %1624 = vmatpush2.msra.mxu0 0.0
        %1625 = vmatprep.subr.mxu0 0.0
        %1626 = vmatpush2.msra.mxu0 0.0
        %1627 = vmatprep.subr.mxu0 0.0
        %1628 = vmatpush2.msra.mxu0 0.0
        %1629 = vmatprep.subr.mxu0 0.0
        %1630 = vmatpush2.msra.mxu0 0.0
        %1631 = vmatprep.subr.mxu0 0.0
        %1632 = vmatpush2.msra.mxu0 0.0
        %1633 = vmatprep.subr.mxu0 0.0
        %1634 = vmatpush2.msra.mxu0 0.0
        %1635 = vmatprep.subr.mxu0 0.0
        %1636 = vmatpush2.msra.mxu0 0.0
        %1637 = vmatprep.subr.mxu0 0.0
        %1638 = vmatpush2.msra.mxu0 0.0
        %1639 = vmatprep.subr.mxu0 0.0
        %1640 = vmatpush2.msra.mxu0 0.0
        %1641 = vmatprep.subr.mxu0 0.0
        %1642 = vmatpush2.msra.mxu0 0.0
        %1643 = vmatprep.subr.mxu0 0.0
        %1644 = vmatpush2.msra.mxu0 0.0
        %1645 = vmatprep.subr.mxu0 0.0
        %1646 = vmatpush2.msra.mxu0 0.0
        %1647 = vmatprep.mubr.f32.mxu0 0.0
        %1648 = vmatmul.mubr.f32.gmra.mxu0 %v1577
        %v1649 = vpop.f32.mrf.mxu0
        %v1650 = vadd.f32 %v1552, %v1649
        %v1651 = vpop.f32.mrf.mxu0
        %1652 = vdwg.mxu0
        %v1653 = vmax.f32 %v1650, 0.0
        %v1654 = vld [vmem:[%s9 + $0x90] sm:$0xff]
        %v1655 = vld [vmem:[%s9 + $0x98] sm:$0xff]
        %v1656 = vld [vmem:[%s9 + $0xa0] sm:$0xff]
        %vm1657 = vcmask 195584
        %v1659 = vsel %vm1657, %v1653, 0
        %1661 = vmatprep.subr.mxu0 0.0
        %1662 = vmatpush1.msra.mxu0 0.0
        %1663 = vmatprep.subr.mxu0 0.0
        %1664 = vmatpush1.msra.mxu0 0.0
        %1665 = vmatprep.subr.mxu0 0.0
        %1666 = vmatpush1.msra.mxu0 0.0
        %1667 = vmatprep.subr.mxu0 0.0
        %1668 = vmatpush1.msra.mxu0 0.0
        %1669 = vmatprep.subr.mxu0 0.0
        %1670 = vmatpush1.msra.mxu0 0.0
        %1671 = vmatprep.subr.mxu0 0.0
        %1672 = vmatpush1.msra.mxu0 0.0
        %1673 = vmatprep.subr.mxu0 0.0
        %1674 = vmatpush1.msra.mxu0 0.0
        %1675 = vmatprep.subr.mxu0 0.0
        %1676 = vmatpush1.msra.mxu0 0.0
        %1677 = vmatprep.subr.mxu0 0.0
        %1678 = vmatpush1.msra.mxu0 0.0
        %1679 = vmatprep.subr.mxu0 0.0
        %1680 = vmatpush1.msra.mxu0 0.0
        %1681 = vmatprep.subr.mxu0 0.0
        %1682 = vmatpush1.msra.mxu0 0.0
        %1683 = vmatprep.subr.mxu0 0.0
        %1684 = vmatpush1.msra.mxu0 0.0
        %1685 = vmatprep.subr.mxu0 0.0
        %1686 = vmatpush1.msra.mxu0 0.0
        %1687 = vmatprep.subr.mxu0 0.0
        %1688 = vmatpush1.msra.mxu0 %v1656
        %1689 = vmatprep.subr.mxu0 0.0
        %1690 = vmatpush1.msra.mxu0 %v1655
        %1691 = vmatprep.subr.mxu0 0.0
        %1692 = vmatpush1.msra.mxu0 %v1654
        %1693 = vmatprep.subr.mxu0 0.0
        %1694 = vmatpush2.msra.mxu0 0.0
        %1695 = vmatprep.subr.mxu0 0.0
        %1696 = vmatpush2.msra.mxu0 0.0
        %1697 = vmatprep.subr.mxu0 0.0
        %1698 = vmatpush2.msra.mxu0 0.0
        %1699 = vmatprep.subr.mxu0 0.0
        %1700 = vmatpush2.msra.mxu0 0.0
        %1701 = vmatprep.subr.mxu0 0.0
        %1702 = vmatpush2.msra.mxu0 0.0
        %1703 = vmatprep.subr.mxu0 0.0
        %1704 = vmatpush2.msra.mxu0 0.0
        %1705 = vmatprep.subr.mxu0 0.0
        %1706 = vmatpush2.msra.mxu0 0.0
        %1707 = vmatprep.subr.mxu0 0.0
        %1708 = vmatpush2.msra.mxu0 0.0
        %1709 = vmatprep.subr.mxu0 0.0
        %1710 = vmatpush2.msra.mxu0 0.0
        %1711 = vmatprep.subr.mxu0 0.0
        %1712 = vmatpush2.msra.mxu0 0.0
        %1713 = vmatprep.subr.mxu0 0.0
        %1714 = vmatpush2.msra.mxu0 0.0
        %1715 = vmatprep.subr.mxu0 0.0
        %1716 = vmatpush2.msra.mxu0 0.0
        %1717 = vmatprep.subr.mxu0 0.0
        %1718 = vmatpush2.msra.mxu0 0.0
        %1719 = vmatprep.subr.mxu0 0.0
        %1720 = vmatpush2.msra.mxu0 0.0
        %1721 = vmatprep.subr.mxu0 0.0
        %1722 = vmatpush2.msra.mxu0 0.0
        %1723 = vmatprep.subr.mxu0 0.0
        %1724 = vmatpush2.msra.mxu0 0.0
        %1725 = vmatprep.mubr.f32.mxu0 0.0
        %1726 = vmatmul.mubr.f32.gmra.mxu0 %v1659
        %v1727 = vpop.f32.mrf.mxu0
        %v1728 = vadd.f32 0.0, %v1727
        %v1729 = vpop.f32.mrf.mxu0
        %1730 = vdwg.mxu0
        %v1731 = vadd.f32 %v1539, %v1728
        %v1732 = vld [vmem:[%s429 + $0x1] sm:$0x1]
        %v1733 = vld [vmem:[%s429 + $0x3] sm:$0x1]
        %v1734 = vld [vmem:[%s429 + $0x5] sm:$0x1]
        %v1735 = vld [vmem:[%s429 + $0x7] sm:$0x1]
        %v1736 = vld [vmem:[%s429 + $0x9] sm:$0x1]
        %v1737 = vld [vmem:[%s429 + $0xb] sm:$0x1]
        %v1738 = vld [vmem:[%s429 + $0xd] sm:$0x1]
        %v1739 = vld [vmem:[%s429 + $0xf] sm:$0x1]
        %v1748 = vrot.slane %v1733, 7
        %v1749 = vsel %vm463, %v1748, %v1732
        %v1750 = vrot.slane %v1734, 6
        %v1751 = vsel %vm466, %v1750, %v1749
        %v1752 = vrot.slane %v1735, 5
        %v1753 = vsel %vm469, %v1752, %v1751
        %v1754 = vrot.slane %v1736, 4
        %v1755 = vsel %vm472, %v1754, %v1753
        %v1756 = vrot.slane %v1737, 3
        %v1757 = vsel %vm475, %v1756, %v1755
        %v1758 = vrot.slane %v1738, 2
        %v1759 = vsel %vm478, %v1758, %v1757
        %v1760 = vrot.slane %v1739, 1
        %v1761 = vsel %vm481, %v1760, %v1759
        %v1762 = vsel %vm1576, %v1761, 0
        %1764 = vmatprep.subr.mxu0 0.0
        %1765 = vmatpush1.msra.mxu0 0.0
        %1766 = vmatprep.subr.mxu0 0.0
        %1767 = vmatpush1.msra.mxu0 0.0
        %1768 = vmatprep.subr.mxu0 0.0
        %1769 = vmatpush1.msra.mxu0 0.0
        %1770 = vmatprep.subr.mxu0 0.0
        %1771 = vmatpush1.msra.mxu0 0.0
        %1772 = vmatprep.subr.mxu0 0.0
        %1773 = vmatpush1.msra.mxu0 0.0
        %1774 = vmatprep.subr.mxu0 0.0
        %1775 = vmatpush1.msra.mxu0 0.0
        %1776 = vmatprep.subr.mxu0 0.0
        %1777 = vmatpush1.msra.mxu0 0.0
        %1778 = vmatprep.subr.mxu0 0.0
        %1779 = vmatpush1.msra.mxu0 0.0
        %1780 = vmatprep.subr.mxu0 0.0
        %1781 = vmatpush1.msra.mxu0 0.0
        %1782 = vmatprep.subr.mxu0 0.0
        %1783 = vmatpush1.msra.mxu0 0.0
        %1784 = vmatprep.subr.mxu0 0.0
        %1785 = vmatpush1.msra.mxu0 0.0
        %1786 = vmatprep.subr.mxu0 0.0
        %1787 = vmatpush1.msra.mxu0 0.0
        %1788 = vmatprep.subr.mxu0 0.0
        %1789 = vmatpush1.msra.mxu0 0.0
        %1790 = vmatprep.subr.mxu0 0.0
        %1791 = vmatpush1.msra.mxu0 0.0
        %1792 = vmatprep.subr.mxu0 0.0
        %1793 = vmatpush1.msra.mxu0 %v1581
        %1794 = vmatprep.subr.mxu0 0.0
        %1795 = vmatpush1.msra.mxu0 %v436
        %1796 = vmatprep.subr.mxu0 0.0
        %1797 = vmatpush2.msra.mxu0 0.0
        %1798 = vmatprep.subr.mxu0 0.0
        %1799 = vmatpush2.msra.mxu0 0.0
        %1800 = vmatprep.subr.mxu0 0.0
        %1801 = vmatpush2.msra.mxu0 0.0
        %1802 = vmatprep.subr.mxu0 0.0
        %1803 = vmatpush2.msra.mxu0 0.0
        %1804 = vmatprep.subr.mxu0 0.0
        %1805 = vmatpush2.msra.mxu0 0.0
        %1806 = vmatprep.subr.mxu0 0.0
        %1807 = vmatpush2.msra.mxu0 0.0
        %1808 = vmatprep.subr.mxu0 0.0
        %1809 = vmatpush2.msra.mxu0 0.0
        %1810 = vmatprep.subr.mxu0 0.0
        %1811 = vmatpush2.msra.mxu0 0.0
        %1812 = vmatprep.subr.mxu0 0.0
        %1813 = vmatpush2.msra.mxu0 0.0
        %1814 = vmatprep.subr.mxu0 0.0
        %1815 = vmatpush2.msra.mxu0 0.0
        %1816 = vmatprep.subr.mxu0 0.0
        %1817 = vmatpush2.msra.mxu0 0.0
        %1818 = vmatprep.subr.mxu0 0.0
        %1819 = vmatpush2.msra.mxu0 0.0
        %1820 = vmatprep.subr.mxu0 0.0
        %1821 = vmatpush2.msra.mxu0 0.0
        %1822 = vmatprep.subr.mxu0 0.0
        %1823 = vmatpush2.msra.mxu0 0.0
        %1824 = vmatprep.subr.mxu0 0.0
        %1825 = vmatpush2.msra.mxu0 0.0
        %1826 = vmatprep.subr.mxu0 0.0
        %1827 = vmatpush2.msra.mxu0 0.0
        %1828 = vmatprep.mubr.f32.mxu0 0.0
        %1829 = vmatmul.mubr.f32.gmra.mxu0 %v1762
        %v1830 = vpop.f32.mrf.mxu0
        %v1831 = vadd.f32 %v1552, %v1830
        %v1832 = vpop.f32.mrf.mxu0
        %1833 = vdwg.mxu0
        %v1834 = vmax.f32 %v1831, 0.0
        %v1835 = vld [vmem:[%s9 + $0xa8] sm:$0xff]
        %v1836 = vld [vmem:[%s9 + $0xb0] sm:$0xff]
        %v1837 = vld [vmem:[%s9 + $0xb8] sm:$0xff]
        %v1839 = vsel %vm1657, %v1834, 0
        %1841 = vmatprep.subr.mxu0 0.0
        %1842 = vmatpush1.msra.mxu0 0.0
        %1843 = vmatprep.subr.mxu0 0.0
        %1844 = vmatpush1.msra.mxu0 0.0
        %1845 = vmatprep.subr.mxu0 0.0
        %1846 = vmatpush1.msra.mxu0 0.0
        %1847 = vmatprep.subr.mxu0 0.0
        %1848 = vmatpush1.msra.mxu0 0.0
        %1849 = vmatprep.subr.mxu0 0.0
        %1850 = vmatpush1.msra.mxu0 0.0
        %1851 = vmatprep.subr.mxu0 0.0
        %1852 = vmatpush1.msra.mxu0 0.0
        %1853 = vmatprep.subr.mxu0 0.0
        %1854 = vmatpush1.msra.mxu0 0.0
        %1855 = vmatprep.subr.mxu0 0.0
        %1856 = vmatpush1.msra.mxu0 0.0
        %1857 = vmatprep.subr.mxu0 0.0
        %1858 = vmatpush1.msra.mxu0 0.0
        %1859 = vmatprep.subr.mxu0 0.0
        %1860 = vmatpush1.msra.mxu0 0.0
        %1861 = vmatprep.subr.mxu0 0.0
        %1862 = vmatpush1.msra.mxu0 0.0
        %1863 = vmatprep.subr.mxu0 0.0
        %1864 = vmatpush1.msra.mxu0 0.0
        %1865 = vmatprep.subr.mxu0 0.0
        %1866 = vmatpush1.msra.mxu0 0.0
        %1867 = vmatprep.subr.mxu0 0.0
        %1868 = vmatpush1.msra.mxu0 %v1837
        %1869 = vmatprep.subr.mxu0 0.0
        %1870 = vmatpush1.msra.mxu0 %v1836
        %1871 = vmatprep.subr.mxu0 0.0
        %1872 = vmatpush1.msra.mxu0 %v1835
        %1873 = vmatprep.subr.mxu0 0.0
        %1874 = vmatpush2.msra.mxu0 0.0
        %1875 = vmatprep.subr.mxu0 0.0
        %1876 = vmatpush2.msra.mxu0 0.0
        %1877 = vmatprep.subr.mxu0 0.0
        %1878 = vmatpush2.msra.mxu0 0.0
        %1879 = vmatprep.subr.mxu0 0.0
        %1880 = vmatpush2.msra.mxu0 0.0
        %1881 = vmatprep.subr.mxu0 0.0
        %1882 = vmatpush2.msra.mxu0 0.0
        %1883 = vmatprep.subr.mxu0 0.0
        %1884 = vmatpush2.msra.mxu0 0.0
        %1885 = vmatprep.subr.mxu0 0.0
        %1886 = vmatpush2.msra.mxu0 0.0
        %1887 = vmatprep.subr.mxu0 0.0
        %1888 = vmatpush2.msra.mxu0 0.0
        %1889 = vmatprep.subr.mxu0 0.0
        %1890 = vmatpush2.msra.mxu0 0.0
        %1891 = vmatprep.subr.mxu0 0.0
        %1892 = vmatpush2.msra.mxu0 0.0
        %1893 = vmatprep.subr.mxu0 0.0
        %1894 = vmatpush2.msra.mxu0 0.0
        %1895 = vmatprep.subr.mxu0 0.0
        %1896 = vmatpush2.msra.mxu0 0.0
        %1897 = vmatprep.subr.mxu0 0.0
        %1898 = vmatpush2.msra.mxu0 0.0
        %1899 = vmatprep.subr.mxu0 0.0
        %1900 = vmatpush2.msra.mxu0 0.0
        %1901 = vmatprep.subr.mxu0 0.0
        %1902 = vmatpush2.msra.mxu0 0.0
        %1903 = vmatprep.subr.mxu0 0.0
        %1904 = vmatpush2.msra.mxu0 0.0
        %1905 = vmatprep.mubr.f32.mxu0 0.0
        %1906 = vmatmul.mubr.f32.gmra.mxu0 %v1839
        %v1907 = vpop.f32.mrf.mxu0
        %v1908 = vadd.f32 0.0, %v1907
        %v1909 = vpop.f32.mrf.mxu0
        %1910 = vdwg.mxu0
        %v1911 = vadd.f32 %v1731, %v1908
        %v1913 = vlaneseq
        %v1914 = vshrl.u32 %v1913, 7
        %v1915 = vsub.s32 0, %v1914
        %v1916 = vrot.slane %v439, %v1915
        %v1918 = vadd.f32 %v1911, %v1916
        %1919 = vst [vmem:[%s412] sm:$0xff] %v1918
        %s1920 = sand.u32 %s279, 1
        %s1921 = scalar_lea.sflag [#allocation3], %s1920
        %s1922 = sand.u32 %s279, 1
        %s1923 = smul.addr %s1922, 8
        %s1924 = scalar_lea.vmem [#allocation2], %s1923
        // Predicated region
        $region65: #{tpu_custom_call.1} parent=63 // pred_check
          %p1925 = pneg %p289
        $region66: #{tpu_custom_call.1} parent=63 // pred_check_branch
          %1927 = sbr.rel (%p1925) target = $region68
        $region67: #{tpu_custom_call.1} parent=63 // pred_region
          %s1929 = ssub.s32 128, 128
          %1930 = vsyncadd %s1921, %s1929
          %s1931 = smul.addr %s25, 128
          %s1932 = scalar_lea.hbm %s11, %s1931
          %s1934 = sshll.u32 %s1924, 4
          %s1935 = int_to_ptr.vmem [resolvable:$true] %s1934
          %1937 = dma.vmem_to_hbm [thread:$0]  %s1935, 128, %s1932, %s1921
        $region68: #{tpu_custom_call.1} parent=63 // pred_fallthru
          _
      $region64: #{tpu_custom_call.1} parent=5 // pred_fallthru
        _
      %p1938 = scmp.le.s32.totalorder 2, %s20
      // Predicated region
      $region69: #{tpu_custom_call.1} parent=5 // pred_check
        %p1939 = pneg %p1938
      $region70: #{tpu_custom_call.1} parent=5 // pred_check_branch
        %1941 = sbr.rel (%p1939) target = $region72
      $region71: #{tpu_custom_call.1} parent=5 // pred_region
        %s1942 = ssub.s32 %s20, 2
        // Predicated region
        $region73: #{tpu_custom_call.1} parent=71 // pred_check
          %p1943 = pneg %p295
        $region74: #{tpu_custom_call.1} parent=71 // pred_check_branch
          %1945 = sbr.rel (%p1943) target = $region76
        $region75: #{tpu_custom_call.1} parent=71 // pred_region
          %s1946 = sand.u32 %s280, 1
          %s1947 = scalar_lea.sflag [#allocation3], %s1946
          %s1948 = sand.u32 %s280, 1
          %s1949 = smul.addr %s1948, 8
          %s1950 = scalar_lea.vmem [#allocation2], %s1949
          %1951 = dma.done %s1947, 128
        $region76: #{tpu_custom_call.1} parent=71 // pred_fallthru
          _
      $region72: #{tpu_custom_call.1} parent=5 // pred_fallthru
        _
    $region6: #{tpu_custom_call.1} parent=1 // loop_footer
      %s24 = sadd.s32 1, %s20
    $region7: #{tpu_custom_call.1} parent=1 // loop_footer_branch
      %19 = sbr.rel target = $region3
    $region8: #{tpu_custom_call.1} parent=1 // loop_exit
      _
    %1952 = vsyncpa [#allocation3], 1
    %s1953 = scalar_lea.sflag [#allocation3], 1
    %1954 = vsyncpa %s1953, 1

</llo_original>
